<compile_context>
chip_gen: v7x
topology: tpu7x:2x2x1
jax: 0.10.0
libtpu: 0.0.40
codegen_flags: <defaults>
</compile_context>

<pallas_src>
import functools
import math

import jax
import jax.numpy as jnp
import numpy as np
from jax.experimental import pallas as pl
from jax.experimental.pallas import tpu as pltpu

D_MODEL = 32
NHEAD = 4
BATCH = 2
SEQ = 8
LN_EPS = 1e-5
BN_EPS = 1e-5


def _layer_norm(z, g, b):
    mu = jnp.mean(z, axis=-1, keepdims=True)
    var = jnp.mean((z - mu) ** 2, axis=-1, keepdims=True)
    return (z - mu) * jax.lax.rsqrt(var + LN_EPS) * g + b


# ---------------------------------------------------------------------------
# Single fused kernel: attention + residual/LN + FFN + residual/LN +
# circular k=3 conv + BatchNorm(eval) + ELU + MaxPool over the batch axis.
# ---------------------------------------------------------------------------
def _fused_encoder_kernel(x_ref, wa_ref, wb_ref, vec_ref, o_ref,
                          *, B, L, D, H, b_out):
    dk = D // H
    N = B * L
    dff = 4 * D
    scale = 1.0 / math.sqrt(dk)

    x = x_ref[...]                       # (N, D) f32
    Wa = wa_ref[...]                     # (D, 8D)  = [wq.T | wk.T | wv.T | wo.T | w1.T]
    Wb = wb_ref[...]                     # (7D, D)  = [w2.T ; dw0.T ; dw1.T ; dw2.T]
    V = vec_ref[...]                     # (16, 4D) packed bias/affine/BN rows

    Wqkv = Wa[:, 0:3 * D]                # (D, 3D)
    Wo = Wa[:, 3 * D:4 * D]              # (D, D)
    W1 = Wa[:, 4 * D:8 * D]              # (D, 4D)   (128-lane aligned slice)
    W2 = Wb[0:dff, :]                    # (4D, D)
    dW0 = Wb[dff:dff + D, :]             # (D, D)
    dW1 = Wb[dff + D:dff + 2 * D, :]
    dW2 = Wb[dff + 2 * D:dff + 3 * D, :]

    def vrow(i, width=D):
        return V[i:i + 1, 0:width]       # (1, width)

    bq, bk, bv, bo = vrow(0), vrow(1), vrow(2), vrow(3)
    b1 = vrow(4, dff)
    b2 = vrow(5)
    g1, be1, g2, be2 = vrow(6), vrow(7), vrow(8), vrow(9)
    db = vrow(10)
    bn_g, bn_b, bn_m, bn_v = vrow(11), vrow(12), vrow(13), vrow(14)

    # ---- attention (dense FullAttention; see TODO in header) ----
    qkv = jnp.dot(x, Wqkv, preferred_element_type=jnp.float32)      # (N, 3D)
    q = (qkv[:, 0:D] + bq).reshape(B, L, D)
    k = (qkv[:, D:2 * D] + bk).reshape(B, L, D)
    v = (qkv[:, 2 * D:3 * D] + bv).reshape(B, L, D)

    heads = []
    for h in range(H):                                              # static loop, H=4
        sl = slice(h * dk, (h + 1) * dk)
        qh, kh, vh = q[:, :, sl], k[:, :, sl], v[:, :, sl]          # (B, L, dk)
        s = jnp.einsum('bld,bsd->bls', qh, kh,
                       preferred_element_type=jnp.float32) * scale  # (B, L, L)
        s = s - jnp.max(s, axis=-1, keepdims=True)
        p = jnp.exp(s)
        p = p / jnp.sum(p, axis=-1, keepdims=True)
        heads.append(jnp.einsum('bls,bsd->bld', p, vh,
                                preferred_element_type=jnp.float32))  # (B, L, dk)
    o_heads = jnp.concatenate(heads, axis=-1).reshape(N, D)         # (N, D)
    attn = jnp.dot(o_heads, Wo, preferred_element_type=jnp.float32) + bo

    # residual + LayerNorm1 (dropout == identity in eval mode)
    xn = _layer_norm(x + attn, g1, be1)

    # FFN: 1x1 conv D->4D -> ReLU -> 1x1 conv 4D->D
    y = jnp.maximum(jnp.dot(xn, W1, preferred_element_type=jnp.float32) + b1, 0.0)
    y = jnp.dot(y, W2, preferred_element_type=jnp.float32) + b2

    # residual + LayerNorm2
    xsa = _layer_norm(xn + y, g2, be2)                              # (N, D)

    # ---- conv_informer: circular k=3 conv over L, batched over B ----
    x3 = xsa.reshape(B, L, D)
    xm = jnp.roll(x3, 1, axis=1).reshape(N, D)      # x[(l-1) mod L]
    xp = jnp.roll(x3, -1, axis=1).reshape(N, D)     # x[(l+1) mod L]
    yc = (jnp.dot(xm, dW0, preferred_element_type=jnp.float32)
          + jnp.dot(xsa, dW1, preferred_element_type=jnp.float32)
          + jnp.dot(xp, dW2, preferred_element_type=jnp.float32)
          + db)
    # BatchNorm1d, eval mode (running stats), per channel D
    yc = (yc - bn_m) * jax.lax.rsqrt(bn_v + BN_EPS) * bn_g + bn_b
    # ELU (alpha = 1)
    yc = jnp.where(yc > 0, yc, jnp.exp(yc) - 1.0)

    # MaxPool1d(kernel=3, stride=2, padding=1) over the *batch* axis
    yc3 = yc.reshape(B, L, D)
    for j in range(b_out):
        idxs = [i for i in range(2 * j - 1, 2 * j + 2) if 0 <= i < B]
        m = yc3[idxs[0]]
        for i in idxs[1:]:
            m = jnp.maximum(m, yc3[i])
        o_ref[j] = m


# ---------------------------------------------------------------------------
# Host-side parameter packing: 3 refs instead of 26.
# ---------------------------------------------------------------------------
def pack_params(p, d_model):
    D = d_model
    dff = 4 * D
    # (D, 8D): [wq.T | wk.T | wv.T | wo.T | w1.T]
    wa = jnp.concatenate([p["wq"].T, p["wk"].T, p["wv"].T, p["wo"].T, p["w1"].T], axis=1)
    # (7D, D): [w2.T ; dw0.T ; dw1.T ; dw2.T]
    wb = jnp.concatenate([p["w2"].T, p["dw0"].T, p["dw1"].T, p["dw2"].T], axis=0)

    def row(vv, width):
        r = jnp.zeros((1, dff), jnp.float32)
        return r.at[:, :width].set(vv.reshape(1, width))

    rows = [row(p["bq"], D), row(p["bk"], D), row(p["bv"], D), row(p["bo"], D),
            row(p["b1"], dff), row(p["b2"], D),
            row(p["g1"], D), row(p["be1"], D), row(p["g2"], D), row(p["be2"], D),
            row(p["db"], D),
            row(p["bn_g"], D), row(p["bn_b"], D), row(p["bn_m"], D), row(p["bn_v"], D),
            jnp.zeros((1, dff), jnp.float32)]      # pad to 16 rows (sublane-aligned)
    vecs = jnp.concatenate(rows, axis=0)           # (16, 4D)
    return wa, wb, vecs


def transformer_encoder_layer(x, packed):
    wa, wb, vecs = packed
    B, L, D = x.shape
    b_out = (B - 1) // 2 + 1
    x2d = x.reshape(B * L, D)

    def full(shape):
        return pl.BlockSpec(shape, lambda i, _n=len(shape): (0,) * _n)

    return pl.pallas_call(
        functools.partial(_fused_encoder_kernel, B=B, L=L, D=D, H=NHEAD, b_out=b_out),
        out_shape=jax.ShapeDtypeStruct((b_out, L, D), jnp.float32),
        grid=(1,),
        in_specs=[full((B * L, D)),
                  full((D, 8 * D)),
                  full((7 * D, D)),
                  full((16, 4 * D))],
        out_specs=full((b_out, L, D)),
        compiler_params=pltpu.CompilerParams(dimension_semantics=("arbitrary",)),
    )(x2d, wa, wb, vecs)


# ---------------------------------------------------------------------------
# Deterministic parameter init (PyTorch-like uniform bounds, fixed seed)
# ---------------------------------------------------------------------------
def init_params(key, d_model):
    dff = 4 * d_model
    keys = jax.random.split(key, 16)

    def lin(k, out_dim, in_dim):
        bound = 1.0 / math.sqrt(in_dim)
        kw, kb = jax.random.split(k)
        w = jax.random.uniform(kw, (out_dim, in_dim), jnp.float32, -bound, bound)
        b = jax.random.uniform(kb, (1, out_dim), jnp.float32, -bound, bound)
        return w, b

    p = {}
    p["wq"], p["bq"] = lin(keys[0], d_model, d_model)
    p["wk"], p["bk"] = lin(keys[1], d_model, d_model)
    p["wv"], p["bv"] = lin(keys[2], d_model, d_model)
    p["wo"], p["bo"] = lin(keys[3], d_model, d_model)
    p["w1"], p["b1"] = lin(keys[4], dff, d_model)      # conv1 (1x1) weight (4D, D)
    p["w2"], p["b2"] = lin(keys[5], d_model, dff)      # conv2 (1x1) weight (D, 4D)
    p["g1"] = jnp.ones((1, d_model), jnp.float32)
    p["be1"] = jnp.zeros((1, d_model), jnp.float32)
    p["g2"] = jnp.ones((1, d_model), jnp.float32)
    p["be2"] = jnp.zeros((1, d_model), jnp.float32)
    # downConv: Conv1d(D, D, kernel_size=3, circular padding)
    bound = 1.0 / math.sqrt(d_model * 3)
    wconv = jax.random.uniform(keys[6], (d_model, d_model, 3), jnp.float32, -bound, bound)
    p["dw0"], p["dw1"], p["dw2"] = wconv[:, :, 0], wconv[:, :, 1], wconv[:, :, 2]
    p["db"] = jax.random.uniform(keys[7], (1, d_model), jnp.float32, -bound, bound)
    # BatchNorm1d (eval mode, running stats) -- non-trivial deterministic values
    p["bn_g"] = 1.0 + 0.1 * jax.random.normal(keys[8], (1, d_model), jnp.float32)
    p["bn_b"] = 0.1 * jax.random.normal(keys[9], (1, d_model), jnp.float32)
    p["bn_m"] = 0.05 * jax.random.normal(keys[10], (1, d_model), jnp.float32)
    p["bn_v"] = 1.0 + 0.1 * jax.random.uniform(keys[11], (1, d_model), jnp.float32)
    return p


# ---------------------------------------------------------------------------
# Pure-JAX reference (mirrors the PyTorch eval-mode forward)
# ---------------------------------------------------------------------------
def reference(x, p):
    B, L, D = x.shape
    H = NHEAD
    dk = D // H
    q = (x @ p["wq"].T + p["bq"]).reshape(B, L, H, dk)
    k = (x @ p["wk"].T + p["bk"]).reshape(B, L, H, dk)
    v = (x @ p["wv"].T + p["bv"]).reshape(B, L, H, dk)
    s = jnp.einsum("blhe,bshe->bhls", q, k) / math.sqrt(dk)
    a = jax.nn.softmax(s, axis=-1)
    o = jnp.einsum("bhls,bshd->blhd", a, v).reshape(B, L, D)
    o = o @ p["wo"].T + p["bo"]
    x1 = x + o

    def ln(z, g, b):
        mu = z.mean(-1, keepdims=True)
        var = ((z - mu) ** 2).mean(-1, keepdims=True)
        return (z - mu) / jnp.sqrt(var + LN_EPS) * g + b

    xn = ln(x1, p["g1"], p["be1"])
    y = jnp.maximum(xn @ p["w1"].T + p["b1"], 0.0)
    y = y @ p["w2"].T + p["b2"]
    xsa = ln(xn + y, p["g2"], p["be2"])

    xm = jnp.roll(xsa, 1, axis=1)
    xp = jnp.roll(xsa, -1, axis=1)
    yc = xm @ p["dw0"].T + xsa @ p["dw1"].T + xp @ p["dw2"].T + p["db"]
    yc = (yc - p["bn_m"]) / jnp.sqrt(p["bn_v"] + BN_EPS) * p["bn_g"] + p["bn_b"]
    yc = jnp.where(yc > 0, yc, jnp.exp(yc) - 1.0)

    b_out = (B - 1) // 2 + 1
    rows = []
    for j in range(b_out):
        vals = [yc[i] for i in range(2 * j - 1, 2 * j + 2) if 0 <= i < B]
        m = vals[0]
        for vv in vals[1:]:
            m = jnp.maximum(m, vv)
        rows.append(m)
    return jnp.stack(rows, axis=0)


if __name__ == "__main__":
    key = jax.random.PRNGKey(0)
    kx, kp = jax.random.split(key)
    x = jax.random.normal(kx, (BATCH, SEQ, D_MODEL), jnp.float32)
    params = init_params(kp, D_MODEL)
    packed = pack_params(params, D_MODEL)

    out = transformer_encoder_layer(x, packed)
    out = jax.block_until_ready(out)

    ref = reference(x, params)
    assert out.shape == ref.shape, (out.shape, ref.shape)
    np.testing.assert_allclose(np.asarray(out), np.asarray(ref), rtol=5e-2, atol=5e-2)
    print("KERNEL_OK")
</pallas_src>

<mosaic_0001>
module attributes {stable_mosaic.version = 11 : i64} {
  func.func @_fused_encoder_kernel(%arg0: i32, %arg1: memref<16x32xf32, #tpu.memory_space<vmem>>, %arg2: memref<32x256xf32, #tpu.memory_space<vmem>>, %arg3: memref<224x32xf32, #tpu.memory_space<vmem>>, %arg4: memref<16x128xf32, #tpu.memory_space<vmem>>, %arg5: memref<1x8x32xf32, #tpu.memory_space<vmem>>) attributes {dimension_semantics = [#tpu.dimension_semantics<arbitrary>], iteration_bounds = array<i64: 1>, scalar_prefetch = 0 : i64, scratch_operands = 0 : i64, tpu.core_type = #tpu.core_type<tc>, window_params = [{pipeline_mode = #tpu.pipeline_mode<synchronous>, transform_indices = @transform_0, window_bounds = array<i64: 16, 32>}, {pipeline_mode = #tpu.pipeline_mode<synchronous>, transform_indices = @transform_1, window_bounds = array<i64: 32, 256>}, {pipeline_mode = #tpu.pipeline_mode<synchronous>, transform_indices = @transform_2, window_bounds = array<i64: 224, 32>}, {pipeline_mode = #tpu.pipeline_mode<synchronous>, transform_indices = @transform_3, window_bounds = array<i64: 16, 128>}, {pipeline_mode = #tpu.pipeline_mode<synchronous>, transform_indices = @transform_4, window_bounds = array<i64: 1, 8, 32>}]} {
    %c0 = arith.constant 0 : index
    %c0_0 = arith.constant 0 : index
    %0 = vector.load %arg1[%c0, %c0_0] : memref<16x32xf32, #tpu.memory_space<vmem>>, vector<16x32xf32>
    %c0_1 = arith.constant 0 : index
    %c0_2 = arith.constant 0 : index
    %1 = vector.load %arg2[%c0_1, %c0_2] : memref<32x256xf32, #tpu.memory_space<vmem>>, vector<32x256xf32>
    %c0_3 = arith.constant 0 : index
    %c0_4 = arith.constant 0 : index
    %2 = vector.load %arg3[%c0_3, %c0_4] : memref<224x32xf32, #tpu.memory_space<vmem>>, vector<224x32xf32>
    %c0_5 = arith.constant 0 : index
    %c0_6 = arith.constant 0 : index
    %3 = vector.load %arg4[%c0_5, %c0_6] : memref<16x128xf32, #tpu.memory_space<vmem>>, vector<16x128xf32>
    %4 = vector.extract_strided_slice %1 {offsets = [0, 0], sizes = [32, 96], strides = [1, 1]} : vector<32x256xf32> to vector<32x96xf32>
    %5 = vector.extract_strided_slice %1 {offsets = [0, 96], sizes = [32, 32], strides = [1, 1]} : vector<32x256xf32> to vector<32x32xf32>
    %6 = vector.extract_strided_slice %1 {offsets = [0, 128], sizes = [32, 128], strides = [1, 1]} : vector<32x256xf32> to vector<32x128xf32>
    %7 = vector.extract_strided_slice %2 {offsets = [0, 0], sizes = [128, 32], strides = [1, 1]} : vector<224x32xf32> to vector<128x32xf32>
    %8 = vector.extract_strided_slice %2 {offsets = [128, 0], sizes = [32, 32], strides = [1, 1]} : vector<224x32xf32> to vector<32x32xf32>
    %9 = vector.extract_strided_slice %2 {offsets = [160, 0], sizes = [32, 32], strides = [1, 1]} : vector<224x32xf32> to vector<32x32xf32>
    %10 = vector.extract_strided_slice %2 {offsets = [192, 0], sizes = [32, 32], strides = [1, 1]} : vector<224x32xf32> to vector<32x32xf32>
    %11 = vector.extract_strided_slice %3 {offsets = [0, 0], sizes = [1, 32], strides = [1, 1]} : vector<16x128xf32> to vector<1x32xf32>
    %12 = vector.extract_strided_slice %3 {offsets = [1, 0], sizes = [1, 32], strides = [1, 1]} : vector<16x128xf32> to vector<1x32xf32>
    %13 = vector.extract_strided_slice %3 {offsets = [2, 0], sizes = [1, 32], strides = [1, 1]} : vector<16x128xf32> to vector<1x32xf32>
    %14 = vector.extract_strided_slice %3 {offsets = [3, 0], sizes = [1, 32], strides = [1, 1]} : vector<16x128xf32> to vector<1x32xf32>
    %15 = vector.extract_strided_slice %3 {offsets = [4, 0], sizes = [1, 128], strides = [1, 1]} : vector<16x128xf32> to vector<1x128xf32>
    %16 = vector.extract_strided_slice %3 {offsets = [5, 0], sizes = [1, 32], strides = [1, 1]} : vector<16x128xf32> to vector<1x32xf32>
    %17 = vector.extract_strided_slice %3 {offsets = [6, 0], sizes = [1, 32], strides = [1, 1]} : vector<16x128xf32> to vector<1x32xf32>
    %18 = vector.extract_strided_slice %3 {offsets = [7, 0], sizes = [1, 32], strides = [1, 1]} : vector<16x128xf32> to vector<1x32xf32>
    %19 = vector.extract_strided_slice %3 {offsets = [8, 0], sizes = [1, 32], strides = [1, 1]} : vector<16x128xf32> to vector<1x32xf32>
    %20 = vector.extract_strided_slice %3 {offsets = [9, 0], sizes = [1, 32], strides = [1, 1]} : vector<16x128xf32> to vector<1x32xf32>
    %21 = vector.extract_strided_slice %3 {offsets = [10, 0], sizes = [1, 32], strides = [1, 1]} : vector<16x128xf32> to vector<1x32xf32>
    %22 = vector.extract_strided_slice %3 {offsets = [11, 0], sizes = [1, 32], strides = [1, 1]} : vector<16x128xf32> to vector<1x32xf32>
    %23 = vector.extract_strided_slice %3 {offsets = [12, 0], sizes = [1, 32], strides = [1, 1]} : vector<16x128xf32> to vector<1x32xf32>
    %24 = vector.extract_strided_slice %3 {offsets = [13, 0], sizes = [1, 32], strides = [1, 1]} : vector<16x128xf32> to vector<1x32xf32>
    %25 = vector.extract_strided_slice %3 {offsets = [14, 0], sizes = [1, 32], strides = [1, 1]} : vector<16x128xf32> to vector<1x32xf32>
    %cst = arith.constant dense<0.000000e+00> : vector<16x96xf32>
    %26 = tpu.matmul %0, %4, %cst {dimension_numbers = #tpu.dot_dimension_numbers<[1], [0], [0], [1], [0, 0, 1, 1], [], []>} : vector<16x32xf32>, vector<32x96xf32>, vector<16x96xf32> -> vector<16x96xf32>
    %27 = vector.extract_strided_slice %26 {offsets = [0, 0], sizes = [16, 32], strides = [1, 1]} : vector<16x96xf32> to vector<16x32xf32>
    %28 = vector.broadcast %11 : vector<1x32xf32> to vector<16x32xf32>
    %29 = arith.addf %27, %28 : vector<16x32xf32>
    %30 = vector.shape_cast %29 : vector<16x32xf32> to vector<2x8x32xf32>
    %31 = vector.extract_strided_slice %26 {offsets = [0, 32], sizes = [16, 32], strides = [1, 1]} : vector<16x96xf32> to vector<16x32xf32>
    %32 = vector.broadcast %12 : vector<1x32xf32> to vector<16x32xf32>
    %33 = arith.addf %31, %32 : vector<16x32xf32>
    %34 = vector.shape_cast %33 : vector<16x32xf32> to vector<2x8x32xf32>
    %35 = vector.extract_strided_slice %26 {offsets = [0, 64], sizes = [16, 32], strides = [1, 1]} : vector<16x96xf32> to vector<16x32xf32>
    %36 = vector.broadcast %13 : vector<1x32xf32> to vector<16x32xf32>
    %37 = arith.addf %35, %36 : vector<16x32xf32>
    %38 = vector.shape_cast %37 : vector<16x32xf32> to vector<2x8x32xf32>
    %39 = vector.extract_strided_slice %30 {offsets = [0, 0, 0], sizes = [2, 8, 8], strides = [1, 1, 1]} : vector<2x8x32xf32> to vector<2x8x8xf32>
    %40 = vector.extract_strided_slice %34 {offsets = [0, 0, 0], sizes = [2, 8, 8], strides = [1, 1, 1]} : vector<2x8x32xf32> to vector<2x8x8xf32>
    %41 = vector.extract_strided_slice %38 {offsets = [0, 0, 0], sizes = [2, 8, 8], strides = [1, 1, 1]} : vector<2x8x32xf32> to vector<2x8x8xf32>
    "tpu.trace_start"() <{level = 10 : i32, message = "bld,bsd->bls"}> : () -> ()
    %cst_7 = arith.constant dense<0.000000e+00> : vector<2x8x8xf32>
    %42 = tpu.matmul %39, %40, %cst_7 {dimension_numbers = #tpu.dot_dimension_numbers<[2], [2], [1], [1], [0, 0, 0, 1, 1, 1], [0], [0]>} : vector<2x8x8xf32>, vector<2x8x8xf32>, vector<2x8x8xf32> -> vector<2x8x8xf32>
    "tpu.trace_stop"() : () -> ()
    %cst_8 = arith.constant 0.353553385 : f32
    %43 = vector.broadcast %cst_8 : f32 to vector<2x8x8xf32>
    %44 = arith.mulf %42, %43 : vector<2x8x8xf32>
    %cst_9 = arith.constant dense<0xFF800000> : vector<2x8xf32>
    %45 = vector.multi_reduction <maximumf>, %44, %cst_9 [2] : vector<2x8x8xf32> to vector<2x8xf32>
    %46 = vector.shape_cast %45 : vector<2x8xf32> to vector<2x8x1xf32>
    %47 = vector.broadcast %46 : vector<2x8x1xf32> to vector<2x8x8xf32>
    %48 = arith.subf %44, %47 : vector<2x8x8xf32>
    %49 = math.exp %48 : vector<2x8x8xf32>
    %cst_10 = arith.constant dense<0.000000e+00> : vector<2x8xf32>
    %50 = vector.multi_reduction <add>, %49, %cst_10 [2] : vector<2x8x8xf32> to vector<2x8xf32>
    %51 = vector.shape_cast %50 : vector<2x8xf32> to vector<2x8x1xf32>
    %52 = vector.broadcast %51 : vector<2x8x1xf32> to vector<2x8x8xf32>
    %53 = arith.divf %49, %52 : vector<2x8x8xf32>
    "tpu.trace_start"() <{level = 10 : i32, message = "bls,bsd->bld"}> : () -> ()
    %cst_11 = arith.constant dense<0.000000e+00> : vector<2x8x8xf32>
    %54 = tpu.matmul %53, %41, %cst_11 {dimension_numbers = #tpu.dot_dimension_numbers<[2], [1], [1], [2], [0, 0, 0, 1, 1, 2], [0], [0]>} : vector<2x8x8xf32>, vector<2x8x8xf32>, vector<2x8x8xf32> -> vector<2x8x8xf32>
    "tpu.trace_stop"() : () -> ()
    %55 = vector.extract_strided_slice %30 {offsets = [0, 0, 8], sizes = [2, 8, 8], strides = [1, 1, 1]} : vector<2x8x32xf32> to vector<2x8x8xf32>
    %56 = vector.extract_strided_slice %34 {offsets = [0, 0, 8], sizes = [2, 8, 8], strides = [1, 1, 1]} : vector<2x8x32xf32> to vector<2x8x8xf32>
    %57 = vector.extract_strided_slice %38 {offsets = [0, 0, 8], sizes = [2, 8, 8], strides = [1, 1, 1]} : vector<2x8x32xf32> to vector<2x8x8xf32>
    "tpu.trace_start"() <{level = 10 : i32, message = "bld,bsd->bls"}> : () -> ()
    %cst_12 = arith.constant dense<0.000000e+00> : vector<2x8x8xf32>
    %58 = tpu.matmul %55, %56, %cst_12 {dimension_numbers = #tpu.dot_dimension_numbers<[2], [2], [1], [1], [0, 0, 0, 1, 1, 1], [0], [0]>} : vector<2x8x8xf32>, vector<2x8x8xf32>, vector<2x8x8xf32> -> vector<2x8x8xf32>
    "tpu.trace_stop"() : () -> ()
    %cst_13 = arith.constant 0.353553385 : f32
    %59 = vector.broadcast %cst_13 : f32 to vector<2x8x8xf32>
    %60 = arith.mulf %58, %59 : vector<2x8x8xf32>
    %cst_14 = arith.constant dense<0xFF800000> : vector<2x8xf32>
    %61 = vector.multi_reduction <maximumf>, %60, %cst_14 [2] : vector<2x8x8xf32> to vector<2x8xf32>
    %62 = vector.shape_cast %61 : vector<2x8xf32> to vector<2x8x1xf32>
    %63 = vector.broadcast %62 : vector<2x8x1xf32> to vector<2x8x8xf32>
    %64 = arith.subf %60, %63 : vector<2x8x8xf32>
    %65 = math.exp %64 : vector<2x8x8xf32>
    %cst_15 = arith.constant dense<0.000000e+00> : vector<2x8xf32>
    %66 = vector.multi_reduction <add>, %65, %cst_15 [2] : vector<2x8x8xf32> to vector<2x8xf32>
    %67 = vector.shape_cast %66 : vector<2x8xf32> to vector<2x8x1xf32>
    %68 = vector.broadcast %67 : vector<2x8x1xf32> to vector<2x8x8xf32>
    %69 = arith.divf %65, %68 : vector<2x8x8xf32>
    "tpu.trace_start"() <{level = 10 : i32, message = "bls,bsd->bld"}> : () -> ()
    %cst_16 = arith.constant dense<0.000000e+00> : vector<2x8x8xf32>
    %70 = tpu.matmul %69, %57, %cst_16 {dimension_numbers = #tpu.dot_dimension_numbers<[2], [1], [1], [2], [0, 0, 0, 1, 1, 2], [0], [0]>} : vector<2x8x8xf32>, vector<2x8x8xf32>, vector<2x8x8xf32> -> vector<2x8x8xf32>
    "tpu.trace_stop"() : () -> ()
    %71 = vector.extract_strided_slice %30 {offsets = [0, 0, 16], sizes = [2, 8, 8], strides = [1, 1, 1]} : vector<2x8x32xf32> to vector<2x8x8xf32>
    %72 = vector.extract_strided_slice %34 {offsets = [0, 0, 16], sizes = [2, 8, 8], strides = [1, 1, 1]} : vector<2x8x32xf32> to vector<2x8x8xf32>
    %73 = vector.extract_strided_slice %38 {offsets = [0, 0, 16], sizes = [2, 8, 8], strides = [1, 1, 1]} : vector<2x8x32xf32> to vector<2x8x8xf32>
    "tpu.trace_start"() <{level = 10 : i32, message = "bld,bsd->bls"}> : () -> ()
    %cst_17 = arith.constant dense<0.000000e+00> : vector<2x8x8xf32>
    %74 = tpu.matmul %71, %72, %cst_17 {dimension_numbers = #tpu.dot_dimension_numbers<[2], [2], [1], [1], [0, 0, 0, 1, 1, 1], [0], [0]>} : vector<2x8x8xf32>, vector<2x8x8xf32>, vector<2x8x8xf32> -> vector<2x8x8xf32>
    "tpu.trace_stop"() : () -> ()
    %cst_18 = arith.constant 0.353553385 : f32
    %75 = vector.broadcast %cst_18 : f32 to vector<2x8x8xf32>
    %76 = arith.mulf %74, %75 : vector<2x8x8xf32>
    %cst_19 = arith.constant dense<0xFF800000> : vector<2x8xf32>
    %77 = vector.multi_reduction <maximumf>, %76, %cst_19 [2] : vector<2x8x8xf32> to vector<2x8xf32>
    %78 = vector.shape_cast %77 : vector<2x8xf32> to vector<2x8x1xf32>
    %79 = vector.broadcast %78 : vector<2x8x1xf32> to vector<2x8x8xf32>
    %80 = arith.subf %76, %79 : vector<2x8x8xf32>
    %81 = math.exp %80 : vector<2x8x8xf32>
    %cst_20 = arith.constant dense<0.000000e+00> : vector<2x8xf32>
    %82 = vector.multi_reduction <add>, %81, %cst_20 [2] : vector<2x8x8xf32> to vector<2x8xf32>
    %83 = vector.shape_cast %82 : vector<2x8xf32> to vector<2x8x1xf32>
    %84 = vector.broadcast %83 : vector<2x8x1xf32> to vector<2x8x8xf32>
    %85 = arith.divf %81, %84 : vector<2x8x8xf32>
    "tpu.trace_start"() <{level = 10 : i32, message = "bls,bsd->bld"}> : () -> ()
    %cst_21 = arith.constant dense<0.000000e+00> : vector<2x8x8xf32>
    %86 = tpu.matmul %85, %73, %cst_21 {dimension_numbers = #tpu.dot_dimension_numbers<[2], [1], [1], [2], [0, 0, 0, 1, 1, 2], [0], [0]>} : vector<2x8x8xf32>, vector<2x8x8xf32>, vector<2x8x8xf32> -> vector<2x8x8xf32>
    "tpu.trace_stop"() : () -> ()
    %87 = vector.extract_strided_slice %30 {offsets = [0, 0, 24], sizes = [2, 8, 8], strides = [1, 1, 1]} : vector<2x8x32xf32> to vector<2x8x8xf32>
    %88 = vector.extract_strided_slice %34 {offsets = [0, 0, 24], sizes = [2, 8, 8], strides = [1, 1, 1]} : vector<2x8x32xf32> to vector<2x8x8xf32>
    %89 = vector.extract_strided_slice %38 {offsets = [0, 0, 24], sizes = [2, 8, 8], strides = [1, 1, 1]} : vector<2x8x32xf32> to vector<2x8x8xf32>
    "tpu.trace_start"() <{level = 10 : i32, message = "bld,bsd->bls"}> : () -> ()
    %cst_22 = arith.constant dense<0.000000e+00> : vector<2x8x8xf32>
    %90 = tpu.matmul %87, %88, %cst_22 {dimension_numbers = #tpu.dot_dimension_numbers<[2], [2], [1], [1], [0, 0, 0, 1, 1, 1], [0], [0]>} : vector<2x8x8xf32>, vector<2x8x8xf32>, vector<2x8x8xf32> -> vector<2x8x8xf32>
    "tpu.trace_stop"() : () -> ()
    %cst_23 = arith.constant 0.353553385 : f32
    %91 = vector.broadcast %cst_23 : f32 to vector<2x8x8xf32>
    %92 = arith.mulf %90, %91 : vector<2x8x8xf32>
    %cst_24 = arith.constant dense<0xFF800000> : vector<2x8xf32>
    %93 = vector.multi_reduction <maximumf>, %92, %cst_24 [2] : vector<2x8x8xf32> to vector<2x8xf32>
    %94 = vector.shape_cast %93 : vector<2x8xf32> to vector<2x8x1xf32>
    %95 = vector.broadcast %94 : vector<2x8x1xf32> to vector<2x8x8xf32>
    %96 = arith.subf %92, %95 : vector<2x8x8xf32>
    %97 = math.exp %96 : vector<2x8x8xf32>
    %cst_25 = arith.constant dense<0.000000e+00> : vector<2x8xf32>
    %98 = vector.multi_reduction <add>, %97, %cst_25 [2] : vector<2x8x8xf32> to vector<2x8xf32>
    %99 = vector.shape_cast %98 : vector<2x8xf32> to vector<2x8x1xf32>
    %100 = vector.broadcast %99 : vector<2x8x1xf32> to vector<2x8x8xf32>
    %101 = arith.divf %97, %100 : vector<2x8x8xf32>
    "tpu.trace_start"() <{level = 10 : i32, message = "bls,bsd->bld"}> : () -> ()
    %cst_26 = arith.constant dense<0.000000e+00> : vector<2x8x8xf32>
    %102 = tpu.matmul %101, %89, %cst_26 {dimension_numbers = #tpu.dot_dimension_numbers<[2], [1], [1], [2], [0, 0, 0, 1, 1, 2], [0], [0]>} : vector<2x8x8xf32>, vector<2x8x8xf32>, vector<2x8x8xf32> -> vector<2x8x8xf32>
    "tpu.trace_stop"() : () -> ()
    %103 = tpu.concatenate %54, %70, %86, %102 in 2 : vector<2x8x8xf32>, vector<2x8x8xf32>, vector<2x8x8xf32>, vector<2x8x8xf32> -> vector<2x8x32xf32>
    %104 = vector.shape_cast %103 : vector<2x8x32xf32> to vector<16x32xf32>
    %cst_27 = arith.constant dense<0.000000e+00> : vector<16x32xf32>
    %105 = tpu.matmul %104, %5, %cst_27 {dimension_numbers = #tpu.dot_dimension_numbers<[1], [0], [0], [1], [0, 0, 1, 1], [], []>} : vector<16x32xf32>, vector<32x32xf32>, vector<16x32xf32> -> vector<16x32xf32>
    %106 = vector.broadcast %14 : vector<1x32xf32> to vector<16x32xf32>
    %107 = arith.addf %105, %106 : vector<16x32xf32>
    %108 = arith.addf %0, %107 : vector<16x32xf32>
    %cst_28 = arith.constant dense<0.000000e+00> : vector<16xf32>
    %109 = vector.multi_reduction <add>, %108, %cst_28 [1] : vector<16x32xf32> to vector<16xf32>
    %110 = vector.shape_cast %109 : vector<16xf32> to vector<16x1xf32>
    %cst_29 = arith.constant 3.200000e+01 : f32
    %111 = vector.broadcast %cst_29 : f32 to vector<16x1xf32>
    %112 = arith.divf %110, %111 : vector<16x1xf32>
    %113 = vector.broadcast %112 : vector<16x1xf32> to vector<16x32xf32>
    %114 = arith.subf %108, %113 : vector<16x32xf32>
    %115 = arith.mulf %114, %114 : vector<16x32xf32>
    %cst_30 = arith.constant dense<0.000000e+00> : vector<16xf32>
    %116 = vector.multi_reduction <add>, %115, %cst_30 [1] : vector<16x32xf32> to vector<16xf32>
    %117 = vector.shape_cast %116 : vector<16xf32> to vector<16x1xf32>
    %cst_31 = arith.constant 3.200000e+01 : f32
    %118 = vector.broadcast %cst_31 : f32 to vector<16x1xf32>
    %119 = arith.divf %117, %118 : vector<16x1xf32>
    %120 = vector.broadcast %112 : vector<16x1xf32> to vector<16x32xf32>
    %121 = arith.subf %108, %120 : vector<16x32xf32>
    %cst_32 = arith.constant 9.99999974E-6 : f32
    %122 = vector.broadcast %cst_32 : f32 to vector<16x1xf32>
    %123 = arith.addf %119, %122 : vector<16x1xf32>
    %124 = math.rsqrt %123 : vector<16x1xf32>
    %125 = vector.broadcast %124 : vector<16x1xf32> to vector<16x32xf32>
    %126 = arith.mulf %121, %125 : vector<16x32xf32>
    %127 = vector.broadcast %17 : vector<1x32xf32> to vector<16x32xf32>
    %128 = arith.mulf %126, %127 : vector<16x32xf32>
    %129 = vector.broadcast %18 : vector<1x32xf32> to vector<16x32xf32>
    %130 = arith.addf %128, %129 : vector<16x32xf32>
    %cst_33 = arith.constant dense<0.000000e+00> : vector<16x128xf32>
    %131 = tpu.matmul %130, %6, %cst_33 {dimension_numbers = #tpu.dot_dimension_numbers<[1], [0], [0], [1], [0, 0, 1, 1], [], []>} : vector<16x32xf32>, vector<32x128xf32>, vector<16x128xf32> -> vector<16x128xf32>
    %132 = vector.broadcast %15 : vector<1x128xf32> to vector<16x128xf32>
    %133 = arith.addf %131, %132 : vector<16x128xf32>
    %cst_34 = arith.constant 0.000000e+00 : f32
    %134 = vector.broadcast %cst_34 : f32 to vector<16x128xf32>
    %135 = arith.maximumf %133, %134 : vector<16x128xf32>
    %cst_35 = arith.constant dense<0.000000e+00> : vector<16x32xf32>
    %136 = tpu.matmul %135, %7, %cst_35 {dimension_numbers = #tpu.dot_dimension_numbers<[1], [0], [0], [1], [0, 0, 1, 1], [], []>} : vector<16x128xf32>, vector<128x32xf32>, vector<16x32xf32> -> vector<16x32xf32>
    %137 = vector.broadcast %16 : vector<1x32xf32> to vector<16x32xf32>
    %138 = arith.addf %136, %137 : vector<16x32xf32>
    %139 = arith.addf %130, %138 : vector<16x32xf32>
    %cst_36 = arith.constant dense<0.000000e+00> : vector<16xf32>
    %140 = vector.multi_reduction <add>, %139, %cst_36 [1] : vector<16x32xf32> to vector<16xf32>
    %141 = vector.shape_cast %140 : vector<16xf32> to vector<16x1xf32>
    %cst_37 = arith.constant 3.200000e+01 : f32
    %142 = vector.broadcast %cst_37 : f32 to vector<16x1xf32>
    %143 = arith.divf %141, %142 : vector<16x1xf32>
    %144 = vector.broadcast %143 : vector<16x1xf32> to vector<16x32xf32>
    %145 = arith.subf %139, %144 : vector<16x32xf32>
    %146 = arith.mulf %145, %145 : vector<16x32xf32>
    %cst_38 = arith.constant dense<0.000000e+00> : vector<16xf32>
    %147 = vector.multi_reduction <add>, %146, %cst_38 [1] : vector<16x32xf32> to vector<16xf32>
    %148 = vector.shape_cast %147 : vector<16xf32> to vector<16x1xf32>
    %cst_39 = arith.constant 3.200000e+01 : f32
    %149 = vector.broadcast %cst_39 : f32 to vector<16x1xf32>
    %150 = arith.divf %148, %149 : vector<16x1xf32>
    %151 = vector.broadcast %143 : vector<16x1xf32> to vector<16x32xf32>
    %152 = arith.subf %139, %151 : vector<16x32xf32>
    %cst_40 = arith.constant 9.99999974E-6 : f32
    %153 = vector.broadcast %cst_40 : f32 to vector<16x1xf32>
    %154 = arith.addf %150, %153 : vector<16x1xf32>
    %155 = math.rsqrt %154 : vector<16x1xf32>
    %156 = vector.broadcast %155 : vector<16x1xf32> to vector<16x32xf32>
    %157 = arith.mulf %152, %156 : vector<16x32xf32>
    %158 = vector.broadcast %19 : vector<1x32xf32> to vector<16x32xf32>
    %159 = arith.mulf %157, %158 : vector<16x32xf32>
    %160 = vector.broadcast %20 : vector<1x32xf32> to vector<16x32xf32>
    %161 = arith.addf %159, %160 : vector<16x32xf32>
    %162 = vector.shape_cast %161 : vector<16x32xf32> to vector<2x8x32xf32>
    %163 = vector.extract_strided_slice %162 {offsets = [0, 7, 0], sizes = [2, 1, 32], strides = [1, 1, 1]} : vector<2x8x32xf32> to vector<2x1x32xf32>
    %164 = vector.extract_strided_slice %162 {offsets = [0, 0, 0], sizes = [2, 7, 32], strides = [1, 1, 1]} : vector<2x8x32xf32> to vector<2x7x32xf32>
    %165 = tpu.concatenate %163, %164 in 1 : vector<2x1x32xf32>, vector<2x7x32xf32> -> vector<2x8x32xf32>
    %166 = vector.shape_cast %165 : vector<2x8x32xf32> to vector<16x32xf32>
    %167 = vector.extract_strided_slice %162 {offsets = [0, 1, 0], sizes = [2, 7, 32], strides = [1, 1, 1]} : vector<2x8x32xf32> to vector<2x7x32xf32>
    %168 = vector.extract_strided_slice %162 {offsets = [0, 0, 0], sizes = [2, 1, 32], strides = [1, 1, 1]} : vector<2x8x32xf32> to vector<2x1x32xf32>
    %169 = tpu.concatenate %167, %168 in 1 : vector<2x7x32xf32>, vector<2x1x32xf32> -> vector<2x8x32xf32>
    %170 = vector.shape_cast %169 : vector<2x8x32xf32> to vector<16x32xf32>
    %cst_41 = arith.constant dense<0.000000e+00> : vector<16x32xf32>
    %171 = tpu.matmul %166, %8, %cst_41 {dimension_numbers = #tpu.dot_dimension_numbers<[1], [0], [0], [1], [0, 0, 1, 1], [], []>} : vector<16x32xf32>, vector<32x32xf32>, vector<16x32xf32> -> vector<16x32xf32>
    %cst_42 = arith.constant dense<0.000000e+00> : vector<16x32xf32>
    %172 = tpu.matmul %161, %9, %cst_42 {dimension_numbers = #tpu.dot_dimension_numbers<[1], [0], [0], [1], [0, 0, 1, 1], [], []>} : vector<16x32xf32>, vector<32x32xf32>, vector<16x32xf32> -> vector<16x32xf32>
    %173 = arith.addf %171, %172 : vector<16x32xf32>
    %cst_43 = arith.constant dense<0.000000e+00> : vector<16x32xf32>
    %174 = tpu.matmul %170, %10, %cst_43 {dimension_numbers = #tpu.dot_dimension_numbers<[1], [0], [0], [1], [0, 0, 1, 1], [], []>} : vector<16x32xf32>, vector<32x32xf32>, vector<16x32xf32> -> vector<16x32xf32>
    %175 = arith.addf %173, %174 : vector<16x32xf32>
    %176 = vector.broadcast %21 : vector<1x32xf32> to vector<16x32xf32>
    %177 = arith.addf %175, %176 : vector<16x32xf32>
    %178 = vector.broadcast %24 : vector<1x32xf32> to vector<16x32xf32>
    %179 = arith.subf %177, %178 : vector<16x32xf32>
    %cst_44 = arith.constant 9.99999974E-6 : f32
    %180 = vector.broadcast %cst_44 : f32 to vector<1x32xf32>
    %181 = arith.addf %25, %180 : vector<1x32xf32>
    %182 = math.rsqrt %181 : vector<1x32xf32>
    %183 = vector.broadcast %182 : vector<1x32xf32> to vector<16x32xf32>
    %184 = arith.mulf %179, %183 : vector<16x32xf32>
    %185 = vector.broadcast %22 : vector<1x32xf32> to vector<16x32xf32>
    %186 = arith.mulf %184, %185 : vector<16x32xf32>
    %187 = vector.broadcast %23 : vector<1x32xf32> to vector<16x32xf32>
    %188 = arith.addf %186, %187 : vector<16x32xf32>
    %cst_45 = arith.constant 0.000000e+00 : f32
    %189 = vector.broadcast %cst_45 : f32 to vector<16x32xf32>
    %190 = arith.cmpf ogt, %188, %189 : vector<16x32xf32>
    %191 = math.exp %188 : vector<16x32xf32>
    %cst_46 = arith.constant 1.000000e+00 : f32
    %192 = vector.broadcast %cst_46 : f32 to vector<16x32xf32>
    %193 = arith.subf %191, %192 : vector<16x32xf32>
    %194 = arith.select %190, %188, %193 : vector<16x32xi1>, vector<16x32xf32>
    %195 = vector.shape_cast %194 : vector<16x32xf32> to vector<2x8x32xf32>
    %196 = vector.extract_strided_slice %195 {offsets = [0, 0, 0], sizes = [1, 8, 32], strides = [1, 1, 1]} : vector<2x8x32xf32> to vector<1x8x32xf32>
    %197 = vector.shape_cast %196 : vector<1x8x32xf32> to vector<8x32xf32>
    %198 = vector.extract_strided_slice %195 {offsets = [1, 0, 0], sizes = [1, 8, 32], strides = [1, 1, 1]} : vector<2x8x32xf32> to vector<1x8x32xf32>
    %199 = vector.shape_cast %198 : vector<1x8x32xf32> to vector<8x32xf32>
    %200 = arith.maximumf %197, %199 : vector<8x32xf32>
    %c0_47 = arith.constant 0 : index
    %c0_48 = arith.constant 0 : index
    %c0_49 = arith.constant 0 : index
    %201 = vector.load %arg5[%c0_47, %c0_48, %c0_49] : memref<1x8x32xf32, #tpu.memory_space<vmem>>, vector<1x8x32xf32>
    %202 = vector.shape_cast %201 : vector<1x8x32xf32> to vector<8x32xf32>
    %203 = vector.shape_cast %200 : vector<8x32xf32> to vector<1x8x32xf32>
    tpu.vector_store %arg5[%c0_47, %c0_48, %c0_49], %203 {strides = array<i32>} : memref<1x8x32xf32, #tpu.memory_space<vmem>>, vector<1x8x32xf32>,
    return
  }
  func.func @transform_0(%arg0: i32) -> (i32, i32) {
    %c0_i32 = arith.constant 0 : i32
    %c0_i32_0 = arith.constant 0 : i32
    %c0_i32_1 = arith.constant 0 : i32
    return %c0_i32, %c0_i32_0 : i32, i32
  }
  func.func @transform_1(%arg0: i32) -> (i32, i32) {
    %c0_i32 = arith.constant 0 : i32
    %c0_i32_0 = arith.constant 0 : i32
    %c0_i32_1 = arith.constant 0 : i32
    return %c0_i32, %c0_i32_0 : i32, i32
  }
  func.func @transform_2(%arg0: i32) -> (i32, i32) {
    %c0_i32 = arith.constant 0 : i32
    %c0_i32_0 = arith.constant 0 : i32
    %c0_i32_1 = arith.constant 0 : i32
    return %c0_i32, %c0_i32_0 : i32, i32
  }
  func.func @transform_3(%arg0: i32) -> (i32, i32) {
    %c0_i32 = arith.constant 0 : i32
    %c0_i32_0 = arith.constant 0 : i32
    %c0_i32_1 = arith.constant 0 : i32
    return %c0_i32, %c0_i32_0 : i32, i32
  }
  func.func @transform_4(%arg0: i32) -> (i32, i32, i32) {
    %c0_i32 = arith.constant 0 : i32
    %c0_i32_0 = arith.constant 0 : i32
    %c0_i32_1 = arith.constant 0 : i32
    %c0_i32_2 = arith.constant 0 : i32
    return %c0_i32, %c0_i32_0, %c0_i32_1 : i32, i32, i32
  }
}

</mosaic_0001>

<llo_original>
// kernel: tpu_custom_call.1
$region0: #{tpu_custom_call.1}
  #allocation0 [shape = 'u32[]', space=smem, size = 0x4, offset = 0x4, fixed_abs, tag = 'smem constant byte address 0x4 - core index']
  #allocation1 [shape = 'u32[144,128]{1,0:T(1,128)}', space=vmem, size = 0x12000, scoped, tag = 'internal scratch']
  %s0 = inlined_call_operand.vmem [shape: f32[16,32], index: 0, kind: input, shape index: {}]
  %s1 = inlined_call_operand.vmem [shape: f32[32,256], index: 1, kind: input, shape index: {}]
  %s2 = inlined_call_operand.vmem [shape: f32[224,32], index: 2, kind: input, shape index: {}]
  %s3 = inlined_call_operand.vmem [shape: f32[16,128], index: 3, kind: input, shape index: {}]
  %s4 = inlined_call_operand.hbm [shape: f32[1,8,32], index: 4, kind: output, shape index: {}]
  %s5 = sld [smem:[#allocation0]]
  $region26: #{tpu_custom_call.1} parent=0
    _
  %s7 = ssub.s32 1, %s5
  %s8 = scalar_select 0, %s7, %s5
  $region1: #{tpu_custom_call.1} parent=0
    #allocation2 [shape = 'u8[4096]{0}', space=vmem, size = 0x1000, scoped, tag = 'output window, operand 0, single buffered']
    #allocation3 [shape = 's32[1]{0}', space=sflag, size = 0x4, scoped, tag = 'scoped memory for tpu_custom_call.1']
    %9 = vsyncpa [#allocation3], 0
    // Predicated region
    $region2: #{tpu_custom_call.1} parent=1 // pred_check
      _
    $region3: #{tpu_custom_call.1} parent=1 // pred_check_branch
      %11 = sbr.rel (0) target = $region5
    $region4: #{tpu_custom_call.1} parent=1 // pred_region
      _
    $region5: #{tpu_custom_call.1} parent=1 // pred_fallthru
      _
    // Predicated region
    $region6: #{tpu_custom_call.1} parent=1 // pred_check
      _
    $region7: #{tpu_custom_call.1} parent=1 // pred_check_branch
      %13 = sbr.rel (0) target = $region9
    $region8: #{tpu_custom_call.1} parent=1 // pred_region
      _
    $region9: #{tpu_custom_call.1} parent=1 // pred_fallthru
      _
    // Predicated region
    $region10: #{tpu_custom_call.1} parent=1 // pred_check
      _
    $region11: #{tpu_custom_call.1} parent=1 // pred_check_branch
      %15 = sbr.rel (0) target = $region13
    $region12: #{tpu_custom_call.1} parent=1 // pred_region
      _
    $region13: #{tpu_custom_call.1} parent=1 // pred_fallthru
      _
    // Predicated region
    $region14: #{tpu_custom_call.1} parent=1 // pred_check
      _
    $region15: #{tpu_custom_call.1} parent=1 // pred_check_branch
      %17 = sbr.rel (0) target = $region17
    $region16: #{tpu_custom_call.1} parent=1 // pred_region
      _
    $region17: #{tpu_custom_call.1} parent=1 // pred_fallthru
      _
    %v18 = vld [vmem:[%s0] sm:$0xff]
    %v19 = vld [vmem:[%s0 + $0x8] sm:$0xff]
    %v20 = vld [vmem:[%s1] sm:$0xff]
    %v21 = vld [vmem:[%s1 + $0x8] sm:$0xff]
    %v22 = vld [vmem:[%s1 + $0x10] sm:$0xff]
    %v23 = vld [vmem:[%s1 + $0x18] sm:$0xff]
    %v24 = vld [vmem:[%s1 + $0x20] sm:$0xff]
    %v25 = vld [vmem:[%s1 + $0x28] sm:$0xff]
    %v26 = vld [vmem:[%s1 + $0x30] sm:$0xff]
    %v27 = vld [vmem:[%s1 + $0x38] sm:$0xff]
    %v28 = vld [vmem:[%s2] sm:$0xff]
    %v29 = vld [vmem:[%s2 + $0x8] sm:$0xff]
    %v30 = vld [vmem:[%s2 + $0x10] sm:$0xff]
    %v31 = vld [vmem:[%s2 + $0x18] sm:$0xff]
    %v32 = vld [vmem:[%s2 + $0x20] sm:$0xff]
    %v33 = vld [vmem:[%s2 + $0x28] sm:$0xff]
    %v34 = vld [vmem:[%s2 + $0x30] sm:$0xff]
    %v35 = vld [vmem:[%s2 + $0x38] sm:$0xff]
    %v36 = vld [vmem:[%s2 + $0x40] sm:$0xff]
    %v37 = vld [vmem:[%s2 + $0x48] sm:$0xff]
    %v38 = vld [vmem:[%s2 + $0x50] sm:$0xff]
    %v39 = vld [vmem:[%s2 + $0x58] sm:$0xff]
    %v40 = vld [vmem:[%s2 + $0x60] sm:$0xff]
    %v41 = vld [vmem:[%s2 + $0x68] sm:$0xff]
    %v42 = vld [vmem:[%s2 + $0x70] sm:$0xff]
    %v43 = vld [vmem:[%s2 + $0x78] sm:$0xff]
    %v44 = vld [vmem:[%s2 + $0x80] sm:$0xff]
    %v45 = vld [vmem:[%s2 + $0x88] sm:$0xff]
    %v46 = vld [vmem:[%s2 + $0x90] sm:$0xff]
    %v47 = vld [vmem:[%s2 + $0x98] sm:$0xff]
    %v48 = vld [vmem:[%s2 + $0xa0] sm:$0xff]
    %v49 = vld [vmem:[%s2 + $0xa8] sm:$0xff]
    %v50 = vld [vmem:[%s2 + $0xb0] sm:$0xff]
    %v51 = vld [vmem:[%s2 + $0xb8] sm:$0xff]
    %v52 = vld [vmem:[%s2 + $0xc0] sm:$0xff]
    %v53 = vld [vmem:[%s2 + $0xc8] sm:$0xff]
    %v54 = vld [vmem:[%s2 + $0xd0] sm:$0xff]
    %v55 = vld [vmem:[%s2 + $0xd8] sm:$0xff]
    %v56 = vld [vmem:[%s3] sm:$0xff]
    %v57 = vld [vmem:[%s3 + $0x8] sm:$0xff]
    %vm58 = vcmask 261120
    %v60 = vsel %vm58, %v18, 0
    %v63 = vsel %vm58, %v19, 0
    %65 = vmatprep.subr.mxu0 0.0
    %66 = vmatpush1.msra.mxu0 %v20
    %67 = vmatprep.subr.mxu0 0.0
    %68 = vmatpush1.msra.mxu0 %v22
    %69 = vmatprep.subr.mxu0 0.0
    %70 = vmatpush1.msra.mxu0 %v24
    %71 = vmatprep.subr.mxu0 0.0
    %72 = vmatpush1.msra.mxu0 %v26
    %73 = vmatprep.subr.mxu0 0.0
    %74 = vmatpush1.msra.mxu0 0.0
    %75 = vmatprep.subr.mxu0 0.0
    %76 = vmatpush1.msra.mxu0 0.0
    %77 = vmatprep.subr.mxu0 0.0
    %78 = vmatpush1.msra.mxu0 0.0
    %79 = vmatprep.subr.mxu0 0.0
    %80 = vmatpush1.msra.mxu0 0.0
    %81 = vmatprep.subr.mxu0 0.0
    %82 = vmatpush1.msra.mxu0 0.0
    %83 = vmatprep.subr.mxu0 0.0
    %84 = vmatpush1.msra.mxu0 0.0
    %85 = vmatprep.subr.mxu0 0.0
    %86 = vmatpush1.msra.mxu0 0.0
    %87 = vmatprep.subr.mxu0 0.0
    %88 = vmatpush1.msra.mxu0 0.0
    %89 = vmatprep.subr.mxu0 0.0
    %90 = vmatpush1.msra.mxu0 0.0
    %91 = vmatprep.subr.mxu0 0.0
    %92 = vmatpush1.msra.mxu0 0.0
    %93 = vmatprep.subr.mxu0 0.0
    %94 = vmatpush1.msra.mxu0 0.0
    %95 = vmatprep.subr.mxu0 0.0
    %96 = vmatpush1.msra.mxu0 0.0
    %97 = vmatprep.subr.mxu0 0.0
    %98 = vmatpush1.msra.mxu0 0.0
    %99 = vmatprep.subr.mxu0 0.0
    %100 = vmatpush1.msra.mxu0 0.0
    %101 = vmatprep.subr.mxu0 0.0
    %102 = vmatpush1.msra.mxu0 0.0
    %103 = vmatprep.subr.mxu0 0.0
    %104 = vmatpush1.msra.mxu0 0.0
    %105 = vmatprep.subr.mxu0 0.0
    %106 = vmatpush1.msra.mxu0 0.0
    %107 = vmatprep.subr.mxu0 0.0
    %108 = vmatpush1.msra.mxu0 0.0
    %109 = vmatprep.subr.mxu0 0.0
    %110 = vmatpush1.msra.mxu0 0.0
    %111 = vmatprep.subr.mxu0 0.0
    %112 = vmatpush1.msra.mxu0 0.0
    %113 = vmatprep.subr.mxu0 0.0
    %114 = vmatpush1.msra.mxu0 0.0
    %115 = vmatprep.subr.mxu0 0.0
    %116 = vmatpush1.msra.mxu0 0.0
    %117 = vmatprep.subr.mxu0 0.0
    %118 = vmatpush1.msra.mxu0 0.0
    %119 = vmatprep.subr.mxu0 0.0
    %120 = vmatpush1.msra.mxu0 0.0
    %121 = vmatprep.subr.mxu0 0.0
    %122 = vmatpush1.msra.mxu0 0.0
    %123 = vmatprep.subr.mxu0 0.0
    %124 = vmatpush1.msra.mxu0 0.0
    %125 = vmatprep.subr.mxu0 0.0
    %126 = vmatpush1.msra.mxu0 0.0
    %127 = vmatprep.subr.mxu0 0.0
    %128 = vmatpush1.msra.mxu0 0.0
    %129 = vmatprep.mubr.f32.mxu0 0.0
    %130 = vmatmul.mubr.f32.gmra.mrb[0].mxu0 %v60
    %v131 = vpop.f32.mrb[0].mxu0
    %v132 = vadd.f32 0.0, %v131
    %v133 = vpop.f32.mrb[0].mxu0
    %134 = vmatprep.mubr.f32.mxu0 0.0
    %135 = vmatmul.mubr.f32.gmra.mrb[0].mxu0 %v63
    %v136 = vpop.f32.mrb[0].mxu0
    %v137 = vadd.f32 0.0, %v136
    %v138 = vpop.f32.mrb[0].mxu0
    %139 = vdwg.mxu0
    %v140 = vlaneseq
    %v141 = vshrl.u32 %v140, 7
    %v142 = vsub.s32 0, %v141
    %v143 = vrot.slane %v56, %v142
    %v144 = vadd.f32 %v132, %v143
    %v145 = vadd.f32 %v137, %v143
    %v146 = vlaneseq
    %v147 = vshrl.u32 %v146, 7
    %v148 = vsub.s32 1, %v147
    %v149 = vrot.slane %v56, %v148
    %151 = vrot.lane.b32.xlu0 %v149, 32
    %v152 = vpop.permute.xlu0 %151
    %v154 = vadd.f32 %v132, %v152
    %v155 = vadd.f32 %v137, %v152
    %v156 = vlaneseq
    %v157 = vshrl.u32 %v156, 7
    %v158 = vsub.s32 2, %v157
    %v159 = vrot.slane %v56, %v158
    %161 = vrot.lane.b32.xlu0 %v159, 64
    %v162 = vpop.permute.xlu0 %161
    %v164 = vadd.f32 %v132, %v162
    %v165 = vadd.f32 %v137, %v162
    %167 = vrot.lane.b32.xlu0 %v154, 96
    %v168 = vpop.permute.xlu0 %167
    %vm169 = vcmask 64512
    %v171 = vsel %vm169, %v144, 0
    %v173 = vsel %vm169, %v168, 0
    %175 = vmatprep.subr.mxu0 0.0
    %176 = vmatpush1.xpose.msra.mxu0 %v173
    %177 = vmatprep.subr.mxu0 0.0
    %178 = vmatpush1.xpose.msra.mxu0 0.0
    %179 = vmatprep.subr.mxu0 0.0
    %180 = vmatpush1.xpose.msra.mxu0 0.0
    %181 = vmatprep.subr.mxu0 0.0
    %182 = vmatpush1.xpose.msra.mxu0 0.0
    %183 = vmatprep.subr.mxu0 0.0
    %184 = vmatpush1.xpose.msra.mxu0 0.0
    %185 = vmatprep.subr.mxu0 0.0
    %186 = vmatpush1.xpose.msra.mxu0 0.0
    %187 = vmatprep.subr.mxu0 0.0
    %188 = vmatpush1.xpose.msra.mxu0 0.0
    %189 = vmatprep.subr.mxu0 0.0
    %190 = vmatpush1.xpose.msra.mxu0 0.0
    %191 = vmatprep.subr.mxu0 0.0
    %192 = vmatpush1.xpose.msra.mxu0 0.0
    %193 = vmatprep.subr.mxu0 0.0
    %194 = vmatpush1.xpose.msra.mxu0 0.0
    %195 = vmatprep.subr.mxu0 0.0
    %196 = vmatpush1.xpose.msra.mxu0 0.0
    %197 = vmatprep.subr.mxu0 0.0
    %198 = vmatpush1.xpose.msra.mxu0 0.0
    %199 = vmatprep.subr.mxu0 0.0
    %200 = vmatpush1.xpose.msra.mxu0 0.0
    %201 = vmatprep.subr.mxu0 0.0
    %202 = vmatpush1.xpose.msra.mxu0 0.0
    %203 = vmatprep.subr.mxu0 0.0
    %204 = vmatpush1.xpose.msra.mxu0 0.0
    %205 = vmatprep.subr.mxu0 0.0
    %206 = vmatpush1.xpose.msra.mxu0 0.0
    %207 = vmatprep.subr.mxu0 0.0
    %208 = vmatpush1.xpose.msra.mxu0 0.0
    %209 = vmatprep.subr.mxu0 0.0
    %210 = vmatpush1.xpose.msra.mxu0 0.0
    %211 = vmatprep.subr.mxu0 0.0
    %212 = vmatpush1.xpose.msra.mxu0 0.0
    %213 = vmatprep.subr.mxu0 0.0
    %214 = vmatpush1.xpose.msra.mxu0 0.0
    %215 = vmatprep.subr.mxu0 0.0
    %216 = vmatpush1.xpose.msra.mxu0 0.0
    %217 = vmatprep.subr.mxu0 0.0
    %218 = vmatpush1.xpose.msra.mxu0 0.0
    %219 = vmatprep.subr.mxu0 0.0
    %220 = vmatpush1.xpose.msra.mxu0 0.0
    %221 = vmatprep.subr.mxu0 0.0
    %222 = vmatpush1.xpose.msra.mxu0 0.0
    %223 = vmatprep.subr.mxu0 0.0
    %224 = vmatpush1.xpose.msra.mxu0 0.0
    %225 = vmatprep.subr.mxu0 0.0
    %226 = vmatpush1.xpose.msra.mxu0 0.0
    %227 = vmatprep.subr.mxu0 0.0
    %228 = vmatpush1.xpose.msra.mxu0 0.0
    %229 = vmatprep.subr.mxu0 0.0
    %230 = vmatpush1.xpose.msra.mxu0 0.0
    %231 = vmatprep.subr.mxu0 0.0
    %232 = vmatpush1.xpose.msra.mxu0 0.0
    %233 = vmatprep.subr.mxu0 0.0
    %234 = vmatpush1.xpose.msra.mxu0 0.0
    %235 = vmatprep.subr.mxu0 0.0
    %236 = vmatpush1.xpose.msra.mxu0 0.0
    %237 = vmatprep.subr.mxu0 0.0
    %238 = vmatpush1.xpose.msra.mxu0 0.0
    %239 = vmatprep.mubr.f32.mxu0 0.0
    %240 = vmatmul.mubr.f32.gmra.mrb[0].mxu0 %v171
    %v241 = vpop.f32.mrb[0].mxu0
    %v242 = vadd.f32 0.0, %v241
    %v243 = vpop.f32.mrb[0].mxu0
    %244 = vdwg.mxu0
    %246 = vrot.lane.b32.xlu0 %v155, 96
    %v247 = vpop.permute.xlu0 %246
    %v249 = vsel %vm169, %v145, 0
    %v251 = vsel %vm169, %v247, 0
    %253 = vmatprep.subr.mxu0 0.0
    %254 = vmatpush1.xpose.msra.mxu0 %v251
    %255 = vmatprep.subr.mxu0 0.0
    %256 = vmatpush1.xpose.msra.mxu0 0.0
    %257 = vmatprep.subr.mxu0 0.0
    %258 = vmatpush1.xpose.msra.mxu0 0.0
    %259 = vmatprep.subr.mxu0 0.0
    %260 = vmatpush1.xpose.msra.mxu0 0.0
    %261 = vmatprep.subr.mxu0 0.0
    %262 = vmatpush1.xpose.msra.mxu0 0.0
    %263 = vmatprep.subr.mxu0 0.0
    %264 = vmatpush1.xpose.msra.mxu0 0.0
    %265 = vmatprep.subr.mxu0 0.0
    %266 = vmatpush1.xpose.msra.mxu0 0.0
    %267 = vmatprep.subr.mxu0 0.0
    %268 = vmatpush1.xpose.msra.mxu0 0.0
    %269 = vmatprep.subr.mxu0 0.0
    %270 = vmatpush1.xpose.msra.mxu0 0.0
    %271 = vmatprep.subr.mxu0 0.0
    %272 = vmatpush1.xpose.msra.mxu0 0.0
    %273 = vmatprep.subr.mxu0 0.0
    %274 = vmatpush1.xpose.msra.mxu0 0.0
    %275 = vmatprep.subr.mxu0 0.0
    %276 = vmatpush1.xpose.msra.mxu0 0.0
    %277 = vmatprep.subr.mxu0 0.0
    %278 = vmatpush1.xpose.msra.mxu0 0.0
    %279 = vmatprep.subr.mxu0 0.0
    %280 = vmatpush1.xpose.msra.mxu0 0.0
    %281 = vmatprep.subr.mxu0 0.0
    %282 = vmatpush1.xpose.msra.mxu0 0.0
    %283 = vmatprep.subr.mxu0 0.0
    %284 = vmatpush1.xpose.msra.mxu0 0.0
    %285 = vmatprep.subr.mxu0 0.0
    %286 = vmatpush1.xpose.msra.mxu0 0.0
    %287 = vmatprep.subr.mxu0 0.0
    %288 = vmatpush1.xpose.msra.mxu0 0.0
    %289 = vmatprep.subr.mxu0 0.0
    %290 = vmatpush1.xpose.msra.mxu0 0.0
    %291 = vmatprep.subr.mxu0 0.0
    %292 = vmatpush1.xpose.msra.mxu0 0.0
    %293 = vmatprep.subr.mxu0 0.0
    %294 = vmatpush1.xpose.msra.mxu0 0.0
    %295 = vmatprep.subr.mxu0 0.0
    %296 = vmatpush1.xpose.msra.mxu0 0.0
    %297 = vmatprep.subr.mxu0 0.0
    %298 = vmatpush1.xpose.msra.mxu0 0.0
    %299 = vmatprep.subr.mxu0 0.0
    %300 = vmatpush1.xpose.msra.mxu0 0.0
    %301 = vmatprep.subr.mxu0 0.0
    %302 = vmatpush1.xpose.msra.mxu0 0.0
    %303 = vmatprep.subr.mxu0 0.0
    %304 = vmatpush1.xpose.msra.mxu0 0.0
    %305 = vmatprep.subr.mxu0 0.0
    %306 = vmatpush1.xpose.msra.mxu0 0.0
    %307 = vmatprep.subr.mxu0 0.0
    %308 = vmatpush1.xpose.msra.mxu0 0.0
    %309 = vmatprep.subr.mxu0 0.0
    %310 = vmatpush1.xpose.msra.mxu0 0.0
    %311 = vmatprep.subr.mxu0 0.0
    %312 = vmatpush1.xpose.msra.mxu0 0.0
    %313 = vmatprep.subr.mxu0 0.0
    %314 = vmatpush1.xpose.msra.mxu0 0.0
    %315 = vmatprep.subr.mxu0 0.0
    %316 = vmatpush1.xpose.msra.mxu0 0.0
    %317 = vmatprep.mubr.f32.mxu0 0.0
    %318 = vmatmul.mubr.f32.gmra.mrb[0].mxu0 %v249
    %v319 = vpop.f32.mrb[0].mxu0
    %v320 = vadd.f32 0.0, %v319
    %v321 = vpop.f32.mrb[0].mxu0
    %322 = vdwg.mxu0
    %v323 = vmul.f32 %v242, 0.35355338
    %v324 = vmul.f32 %v320, 0.35355338
    %v325 = vsel %vm169, %v323, -inf
    %326 = vmax.xlane.f32.xlu0 %v325
    %v327 = vpop.xlane.xlu0 %326
    %v328 = vsel %vm169, %v324, -inf
    %329 = vmax.xlane.f32.xlu0 %v328
    %v330 = vpop.xlane.xlu0 %329
    %v331 = vsub.f32 %v323, %v327
    %v332 = vsub.f32 %v324, %v330
    %v333 = vmul.f32 %v331, 1.442695
    %v334 = vpow.pop %v333
    %v335 = vmul.f32 %v332, 1.442695
    %v336 = vpow.pop %v335
    %v337 = vsel %vm169, %v334, 0.0
    %338 = vadd.xlane.f32.xlu0 %v337
    %v339 = vpop.xlane.xlu0 %338
    %v340 = vsel %vm169, %v336, 0.0
    %341 = vadd.xlane.f32.xlu0 %v340
    %v342 = vpop.xlane.xlu0 %341
    %v343 = vrcp.pop %v339
    %v344 = vmul.f32 %v334, %v343
    %v345 = vrcp.pop %v342
    %v346 = vmul.f32 %v336, %v345
    %348 = vrot.lane.b32.xlu0 %v164, 64
    %v349 = vpop.permute.xlu0 %348
    %v352 = vsel %vm169, %v344, 0
    %354 = vmatprep.subr.mxu0 0.0
    %355 = vmatpush1.msra.mxu0 %v349
    %356 = vmatprep.subr.mxu0 0.0
    %357 = vmatpush1.msra.mxu0 0.0
    %358 = vmatprep.subr.mxu0 0.0
    %359 = vmatpush1.msra.mxu0 0.0
    %360 = vmatprep.subr.mxu0 0.0
    %361 = vmatpush1.msra.mxu0 0.0
    %362 = vmatprep.subr.mxu0 0.0
    %363 = vmatpush1.msra.mxu0 0.0
    %364 = vmatprep.subr.mxu0 0.0
    %365 = vmatpush1.msra.mxu0 0.0
    %366 = vmatprep.subr.mxu0 0.0
    %367 = vmatpush1.msra.mxu0 0.0
    %368 = vmatprep.subr.mxu0 0.0
    %369 = vmatpush1.msra.mxu0 0.0
    %370 = vmatprep.subr.mxu0 0.0
    %371 = vmatpush1.msra.mxu0 0.0
    %372 = vmatprep.subr.mxu0 0.0
    %373 = vmatpush1.msra.mxu0 0.0
    %374 = vmatprep.subr.mxu0 0.0
    %375 = vmatpush1.msra.mxu0 0.0
    %376 = vmatprep.subr.mxu0 0.0
    %377 = vmatpush1.msra.mxu0 0.0
    %378 = vmatprep.subr.mxu0 0.0
    %379 = vmatpush1.msra.mxu0 0.0
    %380 = vmatprep.subr.mxu0 0.0
    %381 = vmatpush1.msra.mxu0 0.0
    %382 = vmatprep.subr.mxu0 0.0
    %383 = vmatpush1.msra.mxu0 0.0
    %384 = vmatprep.subr.mxu0 0.0
    %385 = vmatpush1.msra.mxu0 0.0
    %386 = vmatprep.subr.mxu0 0.0
    %387 = vmatpush1.msra.mxu0 0.0
    %388 = vmatprep.subr.mxu0 0.0
    %389 = vmatpush1.msra.mxu0 0.0
    %390 = vmatprep.subr.mxu0 0.0
    %391 = vmatpush1.msra.mxu0 0.0
    %392 = vmatprep.subr.mxu0 0.0
    %393 = vmatpush1.msra.mxu0 0.0
    %394 = vmatprep.subr.mxu0 0.0
    %395 = vmatpush1.msra.mxu0 0.0
    %396 = vmatprep.subr.mxu0 0.0
    %397 = vmatpush1.msra.mxu0 0.0
    %398 = vmatprep.subr.mxu0 0.0
    %399 = vmatpush1.msra.mxu0 0.0
    %400 = vmatprep.subr.mxu0 0.0
    %401 = vmatpush1.msra.mxu0 0.0
    %402 = vmatprep.subr.mxu0 0.0
    %403 = vmatpush1.msra.mxu0 0.0
    %404 = vmatprep.subr.mxu0 0.0
    %405 = vmatpush1.msra.mxu0 0.0
    %406 = vmatprep.subr.mxu0 0.0
    %407 = vmatpush1.msra.mxu0 0.0
    %408 = vmatprep.subr.mxu0 0.0
    %409 = vmatpush1.msra.mxu0 0.0
    %410 = vmatprep.subr.mxu0 0.0
    %411 = vmatpush1.msra.mxu0 0.0
    %412 = vmatprep.subr.mxu0 0.0
    %413 = vmatpush1.msra.mxu0 0.0
    %414 = vmatprep.subr.mxu0 0.0
    %415 = vmatpush1.msra.mxu0 0.0
    %416 = vmatprep.subr.mxu0 0.0
    %417 = vmatpush1.msra.mxu0 0.0
    %418 = vmatprep.mubr.f32.mxu0 0.0
    %419 = vmatmul.mubr.f32.gmra.mrb[0].mxu0 %v352
    %v420 = vpop.f32.mrb[0].mxu0
    %v421 = vadd.f32 0.0, %v420
    %v422 = vpop.f32.mrb[0].mxu0
    %423 = vdwg.mxu0
    %425 = vrot.lane.b32.xlu0 %v165, 64
    %v426 = vpop.permute.xlu0 %425
    %v429 = vsel %vm169, %v346, 0
    %431 = vmatprep.subr.mxu0 0.0
    %432 = vmatpush1.msra.mxu0 %v426
    %433 = vmatprep.subr.mxu0 0.0
    %434 = vmatpush1.msra.mxu0 0.0
    %435 = vmatprep.subr.mxu0 0.0
    %436 = vmatpush1.msra.mxu0 0.0
    %437 = vmatprep.subr.mxu0 0.0
    %438 = vmatpush1.msra.mxu0 0.0
    %439 = vmatprep.subr.mxu0 0.0
    %440 = vmatpush1.msra.mxu0 0.0
    %441 = vmatprep.subr.mxu0 0.0
    %442 = vmatpush1.msra.mxu0 0.0
    %443 = vmatprep.subr.mxu0 0.0
    %444 = vmatpush1.msra.mxu0 0.0
    %445 = vmatprep.subr.mxu0 0.0
    %446 = vmatpush1.msra.mxu0 0.0
    %447 = vmatprep.subr.mxu0 0.0
    %448 = vmatpush1.msra.mxu0 0.0
    %449 = vmatprep.subr.mxu0 0.0
    %450 = vmatpush1.msra.mxu0 0.0
    %451 = vmatprep.subr.mxu0 0.0
    %452 = vmatpush1.msra.mxu0 0.0
    %453 = vmatprep.subr.mxu0 0.0
    %454 = vmatpush1.msra.mxu0 0.0
    %455 = vmatprep.subr.mxu0 0.0
    %456 = vmatpush1.msra.mxu0 0.0
    %457 = vmatprep.subr.mxu0 0.0
    %458 = vmatpush1.msra.mxu0 0.0
    %459 = vmatprep.subr.mxu0 0.0
    %460 = vmatpush1.msra.mxu0 0.0
    %461 = vmatprep.subr.mxu0 0.0
    %462 = vmatpush1.msra.mxu0 0.0
    %463 = vmatprep.subr.mxu0 0.0
    %464 = vmatpush1.msra.mxu0 0.0
    %465 = vmatprep.subr.mxu0 0.0
    %466 = vmatpush1.msra.mxu0 0.0
    %467 = vmatprep.subr.mxu0 0.0
    %468 = vmatpush1.msra.mxu0 0.0
    %469 = vmatprep.subr.mxu0 0.0
    %470 = vmatpush1.msra.mxu0 0.0
    %471 = vmatprep.subr.mxu0 0.0
    %472 = vmatpush1.msra.mxu0 0.0
    %473 = vmatprep.subr.mxu0 0.0
    %474 = vmatpush1.msra.mxu0 0.0
    %475 = vmatprep.subr.mxu0 0.0
    %476 = vmatpush1.msra.mxu0 0.0
    %477 = vmatprep.subr.mxu0 0.0
    %478 = vmatpush1.msra.mxu0 0.0
    %479 = vmatprep.subr.mxu0 0.0
    %480 = vmatpush1.msra.mxu0 0.0
    %481 = vmatprep.subr.mxu0 0.0
    %482 = vmatpush1.msra.mxu0 0.0
    %483 = vmatprep.subr.mxu0 0.0
    %484 = vmatpush1.msra.mxu0 0.0
    %485 = vmatprep.subr.mxu0 0.0
    %486 = vmatpush1.msra.mxu0 0.0
    %487 = vmatprep.subr.mxu0 0.0
    %488 = vmatpush1.msra.mxu0 0.0
    %489 = vmatprep.subr.mxu0 0.0
    %490 = vmatpush1.msra.mxu0 0.0
    %491 = vmatprep.subr.mxu0 0.0
    %492 = vmatpush1.msra.mxu0 0.0
    %493 = vmatprep.subr.mxu0 0.0
    %494 = vmatpush1.msra.mxu0 0.0
    %495 = vmatprep.mubr.f32.mxu0 0.0
    %496 = vmatmul.mubr.f32.gmra.mrb[0].mxu0 %v429
    %v497 = vpop.f32.mrb[0].mxu0
    %v498 = vadd.f32 0.0, %v497
    %v499 = vpop.f32.mrb[0].mxu0
    %500 = vdwg.mxu0
    %501 = vrot.lane.b32.xlu0 %v144, 120
    %v502 = vpop.permute.xlu0 %501
    %503 = vrot.lane.b32.xlu0 %v154, 88
    %v504 = vpop.permute.xlu0 %503
    %v505 = vsel %vm169, %v502, 0
    %v507 = vsel %vm169, %v504, 0
    %509 = vmatprep.subr.mxu0 0.0
    %510 = vmatpush1.xpose.msra.mxu0 %v507
    %511 = vmatprep.subr.mxu0 0.0
    %512 = vmatpush1.xpose.msra.mxu0 0.0
    %513 = vmatprep.subr.mxu0 0.0
    %514 = vmatpush1.xpose.msra.mxu0 0.0
    %515 = vmatprep.subr.mxu0 0.0
    %516 = vmatpush1.xpose.msra.mxu0 0.0
    %517 = vmatprep.subr.mxu0 0.0
    %518 = vmatpush1.xpose.msra.mxu0 0.0
    %519 = vmatprep.subr.mxu0 0.0
    %520 = vmatpush1.xpose.msra.mxu0 0.0
    %521 = vmatprep.subr.mxu0 0.0
    %522 = vmatpush1.xpose.msra.mxu0 0.0
    %523 = vmatprep.subr.mxu0 0.0
    %524 = vmatpush1.xpose.msra.mxu0 0.0
    %525 = vmatprep.subr.mxu0 0.0
    %526 = vmatpush1.xpose.msra.mxu0 0.0
    %527 = vmatprep.subr.mxu0 0.0
    %528 = vmatpush1.xpose.msra.mxu0 0.0
    %529 = vmatprep.subr.mxu0 0.0
    %530 = vmatpush1.xpose.msra.mxu0 0.0
    %531 = vmatprep.subr.mxu0 0.0
    %532 = vmatpush1.xpose.msra.mxu0 0.0
    %533 = vmatprep.subr.mxu0 0.0
    %534 = vmatpush1.xpose.msra.mxu0 0.0
    %535 = vmatprep.subr.mxu0 0.0
    %536 = vmatpush1.xpose.msra.mxu0 0.0
    %537 = vmatprep.subr.mxu0 0.0
    %538 = vmatpush1.xpose.msra.mxu0 0.0
    %539 = vmatprep.subr.mxu0 0.0
    %540 = vmatpush1.xpose.msra.mxu0 0.0
    %541 = vmatprep.subr.mxu0 0.0
    %542 = vmatpush1.xpose.msra.mxu0 0.0
    %543 = vmatprep.subr.mxu0 0.0
    %544 = vmatpush1.xpose.msra.mxu0 0.0
    %545 = vmatprep.subr.mxu0 0.0
    %546 = vmatpush1.xpose.msra.mxu0 0.0
    %547 = vmatprep.subr.mxu0 0.0
    %548 = vmatpush1.xpose.msra.mxu0 0.0
    %549 = vmatprep.subr.mxu0 0.0
    %550 = vmatpush1.xpose.msra.mxu0 0.0
    %551 = vmatprep.subr.mxu0 0.0
    %552 = vmatpush1.xpose.msra.mxu0 0.0
    %553 = vmatprep.subr.mxu0 0.0
    %554 = vmatpush1.xpose.msra.mxu0 0.0
    %555 = vmatprep.subr.mxu0 0.0
    %556 = vmatpush1.xpose.msra.mxu0 0.0
    %557 = vmatprep.subr.mxu0 0.0
    %558 = vmatpush1.xpose.msra.mxu0 0.0
    %559 = vmatprep.subr.mxu0 0.0
    %560 = vmatpush1.xpose.msra.mxu0 0.0
    %561 = vmatprep.subr.mxu0 0.0
    %562 = vmatpush1.xpose.msra.mxu0 0.0
    %563 = vmatprep.subr.mxu0 0.0
    %564 = vmatpush1.xpose.msra.mxu0 0.0
    %565 = vmatprep.subr.mxu0 0.0
    %566 = vmatpush1.xpose.msra.mxu0 0.0
    %567 = vmatprep.subr.mxu0 0.0
    %568 = vmatpush1.xpose.msra.mxu0 0.0
    %569 = vmatprep.subr.mxu0 0.0
    %570 = vmatpush1.xpose.msra.mxu0 0.0
    %571 = vmatprep.subr.mxu0 0.0
    %572 = vmatpush1.xpose.msra.mxu0 0.0
    %573 = vmatprep.mubr.f32.mxu0 0.0
    %574 = vmatmul.mubr.f32.gmra.mrb[0].mxu0 %v505
    %v575 = vpop.f32.mrb[0].mxu0
    %v576 = vadd.f32 0.0, %v575
    %v577 = vpop.f32.mrb[0].mxu0
    %578 = vdwg.mxu0
    %579 = vrot.lane.b32.xlu0 %v145, 120
    %v580 = vpop.permute.xlu0 %579
    %581 = vrot.lane.b32.xlu0 %v155, 88
    %v582 = vpop.permute.xlu0 %581
    %v583 = vsel %vm169, %v580, 0
    %v585 = vsel %vm169, %v582, 0
    %587 = vmatprep.subr.mxu0 0.0
    %588 = vmatpush1.xpose.msra.mxu0 %v585
    %589 = vmatprep.subr.mxu0 0.0
    %590 = vmatpush1.xpose.msra.mxu0 0.0
    %591 = vmatprep.subr.mxu0 0.0
    %592 = vmatpush1.xpose.msra.mxu0 0.0
    %593 = vmatprep.subr.mxu0 0.0
    %594 = vmatpush1.xpose.msra.mxu0 0.0
    %595 = vmatprep.subr.mxu0 0.0
    %596 = vmatpush1.xpose.msra.mxu0 0.0
    %597 = vmatprep.subr.mxu0 0.0
    %598 = vmatpush1.xpose.msra.mxu0 0.0
    %599 = vmatprep.subr.mxu0 0.0
    %600 = vmatpush1.xpose.msra.mxu0 0.0
    %601 = vmatprep.subr.mxu0 0.0
    %602 = vmatpush1.xpose.msra.mxu0 0.0
    %603 = vmatprep.subr.mxu0 0.0
    %604 = vmatpush1.xpose.msra.mxu0 0.0
    %605 = vmatprep.subr.mxu0 0.0
    %606 = vmatpush1.xpose.msra.mxu0 0.0
    %607 = vmatprep.subr.mxu0 0.0
    %608 = vmatpush1.xpose.msra.mxu0 0.0
    %609 = vmatprep.subr.mxu0 0.0
    %610 = vmatpush1.xpose.msra.mxu0 0.0
    %611 = vmatprep.subr.mxu0 0.0
    %612 = vmatpush1.xpose.msra.mxu0 0.0
    %613 = vmatprep.subr.mxu0 0.0
    %614 = vmatpush1.xpose.msra.mxu0 0.0
    %615 = vmatprep.subr.mxu0 0.0
    %616 = vmatpush1.xpose.msra.mxu0 0.0
    %617 = vmatprep.subr.mxu0 0.0
    %618 = vmatpush1.xpose.msra.mxu0 0.0
    %619 = vmatprep.subr.mxu0 0.0
    %620 = vmatpush1.xpose.msra.mxu0 0.0
    %621 = vmatprep.subr.mxu0 0.0
    %622 = vmatpush1.xpose.msra.mxu0 0.0
    %623 = vmatprep.subr.mxu0 0.0
    %624 = vmatpush1.xpose.msra.mxu0 0.0
    %625 = vmatprep.subr.mxu0 0.0
    %626 = vmatpush1.xpose.msra.mxu0 0.0
    %627 = vmatprep.subr.mxu0 0.0
    %628 = vmatpush1.xpose.msra.mxu0 0.0
    %629 = vmatprep.subr.mxu0 0.0
    %630 = vmatpush1.xpose.msra.mxu0 0.0
    %631 = vmatprep.subr.mxu0 0.0
    %632 = vmatpush1.xpose.msra.mxu0 0.0
    %633 = vmatprep.subr.mxu0 0.0
    %634 = vmatpush1.xpose.msra.mxu0 0.0
    %635 = vmatprep.subr.mxu0 0.0
    %636 = vmatpush1.xpose.msra.mxu0 0.0
    %637 = vmatprep.subr.mxu0 0.0
    %638 = vmatpush1.xpose.msra.mxu0 0.0
    %639 = vmatprep.subr.mxu0 0.0
    %640 = vmatpush1.xpose.msra.mxu0 0.0
    %641 = vmatprep.subr.mxu0 0.0
    %642 = vmatpush1.xpose.msra.mxu0 0.0
    %643 = vmatprep.subr.mxu0 0.0
    %644 = vmatpush1.xpose.msra.mxu0 0.0
    %645 = vmatprep.subr.mxu0 0.0
    %646 = vmatpush1.xpose.msra.mxu0 0.0
    %647 = vmatprep.subr.mxu0 0.0
    %648 = vmatpush1.xpose.msra.mxu0 0.0
    %649 = vmatprep.subr.mxu0 0.0
    %650 = vmatpush1.xpose.msra.mxu0 0.0
    %651 = vmatprep.mubr.f32.mxu0 0.0
    %652 = vmatmul.mubr.f32.gmra.mrb[0].mxu0 %v583
    %v653 = vpop.f32.mrb[0].mxu0
    %v654 = vadd.f32 0.0, %v653
    %v655 = vpop.f32.mrb[0].mxu0
    %656 = vdwg.mxu0
    %v657 = vmul.f32 %v576, 0.35355338
    %v658 = vmul.f32 %v654, 0.35355338
    %v659 = vsel %vm169, %v657, -inf
    %660 = vmax.xlane.f32.xlu0 %v659
    %v661 = vpop.xlane.xlu0 %660
    %v662 = vsel %vm169, %v658, -inf
    %663 = vmax.xlane.f32.xlu0 %v662
    %v664 = vpop.xlane.xlu0 %663
    %v665 = vsub.f32 %v657, %v661
    %v666 = vsub.f32 %v658, %v664
    %v667 = vmul.f32 %v665, 1.442695
    %v668 = vpow.pop %v667
    %v669 = vmul.f32 %v666, 1.442695
    %v670 = vpow.pop %v669
    %v671 = vsel %vm169, %v668, 0.0
    %672 = vadd.xlane.f32.xlu0 %v671
    %v673 = vpop.xlane.xlu0 %672
    %v674 = vsel %vm169, %v670, 0.0
    %675 = vadd.xlane.f32.xlu0 %v674
    %v676 = vpop.xlane.xlu0 %675
    %v677 = vrcp.pop %v673
    %v678 = vmul.f32 %v668, %v677
    %v679 = vrcp.pop %v676
    %v680 = vmul.f32 %v670, %v679
    %681 = vrot.lane.b32.xlu0 %v164, 56
    %v682 = vpop.permute.xlu0 %681
    %v685 = vsel %vm169, %v678, 0
    %687 = vmatprep.subr.mxu0 0.0
    %688 = vmatpush1.msra.mxu0 %v682
    %689 = vmatprep.subr.mxu0 0.0
    %690 = vmatpush1.msra.mxu0 0.0
    %691 = vmatprep.subr.mxu0 0.0
    %692 = vmatpush1.msra.mxu0 0.0
    %693 = vmatprep.subr.mxu0 0.0
    %694 = vmatpush1.msra.mxu0 0.0
    %695 = vmatprep.subr.mxu0 0.0
    %696 = vmatpush1.msra.mxu0 0.0
    %697 = vmatprep.subr.mxu0 0.0
    %698 = vmatpush1.msra.mxu0 0.0
    %699 = vmatprep.subr.mxu0 0.0
    %700 = vmatpush1.msra.mxu0 0.0
    %701 = vmatprep.subr.mxu0 0.0
    %702 = vmatpush1.msra.mxu0 0.0
    %703 = vmatprep.subr.mxu0 0.0
    %704 = vmatpush1.msra.mxu0 0.0
    %705 = vmatprep.subr.mxu0 0.0
    %706 = vmatpush1.msra.mxu0 0.0
    %707 = vmatprep.subr.mxu0 0.0
    %708 = vmatpush1.msra.mxu0 0.0
    %709 = vmatprep.subr.mxu0 0.0
    %710 = vmatpush1.msra.mxu0 0.0
    %711 = vmatprep.subr.mxu0 0.0
    %712 = vmatpush1.msra.mxu0 0.0
    %713 = vmatprep.subr.mxu0 0.0
    %714 = vmatpush1.msra.mxu0 0.0
    %715 = vmatprep.subr.mxu0 0.0
    %716 = vmatpush1.msra.mxu0 0.0
    %717 = vmatprep.subr.mxu0 0.0
    %718 = vmatpush1.msra.mxu0 0.0
    %719 = vmatprep.subr.mxu0 0.0
    %720 = vmatpush1.msra.mxu0 0.0
    %721 = vmatprep.subr.mxu0 0.0
    %722 = vmatpush1.msra.mxu0 0.0
    %723 = vmatprep.subr.mxu0 0.0
    %724 = vmatpush1.msra.mxu0 0.0
    %725 = vmatprep.subr.mxu0 0.0
    %726 = vmatpush1.msra.mxu0 0.0
    %727 = vmatprep.subr.mxu0 0.0
    %728 = vmatpush1.msra.mxu0 0.0
    %729 = vmatprep.subr.mxu0 0.0
    %730 = vmatpush1.msra.mxu0 0.0
    %731 = vmatprep.subr.mxu0 0.0
    %732 = vmatpush1.msra.mxu0 0.0
    %733 = vmatprep.subr.mxu0 0.0
    %734 = vmatpush1.msra.mxu0 0.0
    %735 = vmatprep.subr.mxu0 0.0
    %736 = vmatpush1.msra.mxu0 0.0
    %737 = vmatprep.subr.mxu0 0.0
    %738 = vmatpush1.msra.mxu0 0.0
    %739 = vmatprep.subr.mxu0 0.0
    %740 = vmatpush1.msra.mxu0 0.0
    %741 = vmatprep.subr.mxu0 0.0
    %742 = vmatpush1.msra.mxu0 0.0
    %743 = vmatprep.subr.mxu0 0.0
    %744 = vmatpush1.msra.mxu0 0.0
    %745 = vmatprep.subr.mxu0 0.0
    %746 = vmatpush1.msra.mxu0 0.0
    %747 = vmatprep.subr.mxu0 0.0
    %748 = vmatpush1.msra.mxu0 0.0
    %749 = vmatprep.subr.mxu0 0.0
    %750 = vmatpush1.msra.mxu0 0.0
    %751 = vmatprep.mubr.f32.mxu0 0.0
    %752 = vmatmul.mubr.f32.gmra.mrb[0].mxu0 %v685
    %v753 = vpop.f32.mrb[0].mxu0
    %v754 = vadd.f32 0.0, %v753
    %v755 = vpop.f32.mrb[0].mxu0
    %756 = vdwg.mxu0
    %757 = vrot.lane.b32.xlu0 %v165, 56
    %v758 = vpop.permute.xlu0 %757
    %v761 = vsel %vm169, %v680, 0
    %763 = vmatprep.subr.mxu0 0.0
    %764 = vmatpush1.msra.mxu0 %v758
    %765 = vmatprep.subr.mxu0 0.0
    %766 = vmatpush1.msra.mxu0 0.0
    %767 = vmatprep.subr.mxu0 0.0
    %768 = vmatpush1.msra.mxu0 0.0
    %769 = vmatprep.subr.mxu0 0.0
    %770 = vmatpush1.msra.mxu0 0.0
    %771 = vmatprep.subr.mxu0 0.0
    %772 = vmatpush1.msra.mxu0 0.0
    %773 = vmatprep.subr.mxu0 0.0
    %774 = vmatpush1.msra.mxu0 0.0
    %775 = vmatprep.subr.mxu0 0.0
    %776 = vmatpush1.msra.mxu0 0.0
    %777 = vmatprep.subr.mxu0 0.0
    %778 = vmatpush1.msra.mxu0 0.0
    %779 = vmatprep.subr.mxu0 0.0
    %780 = vmatpush1.msra.mxu0 0.0
    %781 = vmatprep.subr.mxu0 0.0
    %782 = vmatpush1.msra.mxu0 0.0
    %783 = vmatprep.subr.mxu0 0.0
    %784 = vmatpush1.msra.mxu0 0.0
    %785 = vmatprep.subr.mxu0 0.0
    %786 = vmatpush1.msra.mxu0 0.0
    %787 = vmatprep.subr.mxu0 0.0
    %788 = vmatpush1.msra.mxu0 0.0
    %789 = vmatprep.subr.mxu0 0.0
    %790 = vmatpush1.msra.mxu0 0.0
    %791 = vmatprep.subr.mxu0 0.0
    %792 = vmatpush1.msra.mxu0 0.0
    %793 = vmatprep.subr.mxu0 0.0
    %794 = vmatpush1.msra.mxu0 0.0
    %795 = vmatprep.subr.mxu0 0.0
    %796 = vmatpush1.msra.mxu0 0.0
    %797 = vmatprep.subr.mxu0 0.0
    %798 = vmatpush1.msra.mxu0 0.0
    %799 = vmatprep.subr.mxu0 0.0
    %800 = vmatpush1.msra.mxu0 0.0
    %801 = vmatprep.subr.mxu0 0.0
    %802 = vmatpush1.msra.mxu0 0.0
    %803 = vmatprep.subr.mxu0 0.0
    %804 = vmatpush1.msra.mxu0 0.0
    %805 = vmatprep.subr.mxu0 0.0
    %806 = vmatpush1.msra.mxu0 0.0
    %807 = vmatprep.subr.mxu0 0.0
    %808 = vmatpush1.msra.mxu0 0.0
    %809 = vmatprep.subr.mxu0 0.0
    %810 = vmatpush1.msra.mxu0 0.0
    %811 = vmatprep.subr.mxu0 0.0
    %812 = vmatpush1.msra.mxu0 0.0
    %813 = vmatprep.subr.mxu0 0.0
    %814 = vmatpush1.msra.mxu0 0.0
    %815 = vmatprep.subr.mxu0 0.0
    %816 = vmatpush1.msra.mxu0 0.0
    %817 = vmatprep.subr.mxu0 0.0
    %818 = vmatpush1.msra.mxu0 0.0
    %819 = vmatprep.subr.mxu0 0.0
    %820 = vmatpush1.msra.mxu0 0.0
    %821 = vmatprep.subr.mxu0 0.0
    %822 = vmatpush1.msra.mxu0 0.0
    %823 = vmatprep.subr.mxu0 0.0
    %824 = vmatpush1.msra.mxu0 0.0
    %825 = vmatprep.subr.mxu0 0.0
    %826 = vmatpush1.msra.mxu0 0.0
    %827 = vmatprep.mubr.f32.mxu0 0.0
    %828 = vmatmul.mubr.f32.gmra.mrb[0].mxu0 %v761
    %v829 = vpop.f32.mrb[0].mxu0
    %v830 = vadd.f32 0.0, %v829
    %v831 = vpop.f32.mrb[0].mxu0
    %832 = vdwg.mxu0
    %833 = vrot.lane.b32.xlu0 %v144, 112
    %v834 = vpop.permute.xlu0 %833
    %835 = vrot.lane.b32.xlu0 %v154, 80
    %v836 = vpop.permute.xlu0 %835
    %v837 = vsel %vm169, %v834, 0
    %v839 = vsel %vm169, %v836, 0
    %841 = vmatprep.subr.mxu0 0.0
    %842 = vmatpush1.xpose.msra.mxu0 %v839
    %843 = vmatprep.subr.mxu0 0.0
    %844 = vmatpush1.xpose.msra.mxu0 0.0
    %845 = vmatprep.subr.mxu0 0.0
    %846 = vmatpush1.xpose.msra.mxu0 0.0
    %847 = vmatprep.subr.mxu0 0.0
    %848 = vmatpush1.xpose.msra.mxu0 0.0
    %849 = vmatprep.subr.mxu0 0.0
    %850 = vmatpush1.xpose.msra.mxu0 0.0
    %851 = vmatprep.subr.mxu0 0.0
    %852 = vmatpush1.xpose.msra.mxu0 0.0
    %853 = vmatprep.subr.mxu0 0.0
    %854 = vmatpush1.xpose.msra.mxu0 0.0
    %855 = vmatprep.subr.mxu0 0.0
    %856 = vmatpush1.xpose.msra.mxu0 0.0
    %857 = vmatprep.subr.mxu0 0.0
    %858 = vmatpush1.xpose.msra.mxu0 0.0
    %859 = vmatprep.subr.mxu0 0.0
    %860 = vmatpush1.xpose.msra.mxu0 0.0
    %861 = vmatprep.subr.mxu0 0.0
    %862 = vmatpush1.xpose.msra.mxu0 0.0
    %863 = vmatprep.subr.mxu0 0.0
    %864 = vmatpush1.xpose.msra.mxu0 0.0
    %865 = vmatprep.subr.mxu0 0.0
    %866 = vmatpush1.xpose.msra.mxu0 0.0
    %867 = vmatprep.subr.mxu0 0.0
    %868 = vmatpush1.xpose.msra.mxu0 0.0
    %869 = vmatprep.subr.mxu0 0.0
    %870 = vmatpush1.xpose.msra.mxu0 0.0
    %871 = vmatprep.subr.mxu0 0.0
    %872 = vmatpush1.xpose.msra.mxu0 0.0
    %873 = vmatprep.subr.mxu0 0.0
    %874 = vmatpush1.xpose.msra.mxu0 0.0
    %875 = vmatprep.subr.mxu0 0.0
    %876 = vmatpush1.xpose.msra.mxu0 0.0
    %877 = vmatprep.subr.mxu0 0.0
    %878 = vmatpush1.xpose.msra.mxu0 0.0
    %879 = vmatprep.subr.mxu0 0.0
    %880 = vmatpush1.xpose.msra.mxu0 0.0
    %881 = vmatprep.subr.mxu0 0.0
    %882 = vmatpush1.xpose.msra.mxu0 0.0
    %883 = vmatprep.subr.mxu0 0.0
    %884 = vmatpush1.xpose.msra.mxu0 0.0
    %885 = vmatprep.subr.mxu0 0.0
    %886 = vmatpush1.xpose.msra.mxu0 0.0
    %887 = vmatprep.subr.mxu0 0.0
    %888 = vmatpush1.xpose.msra.mxu0 0.0
    %889 = vmatprep.subr.mxu0 0.0
    %890 = vmatpush1.xpose.msra.mxu0 0.0
    %891 = vmatprep.subr.mxu0 0.0
    %892 = vmatpush1.xpose.msra.mxu0 0.0
    %893 = vmatprep.subr.mxu0 0.0
    %894 = vmatpush1.xpose.msra.mxu0 0.0
    %895 = vmatprep.subr.mxu0 0.0
    %896 = vmatpush1.xpose.msra.mxu0 0.0
    %897 = vmatprep.subr.mxu0 0.0
    %898 = vmatpush1.xpose.msra.mxu0 0.0
    %899 = vmatprep.subr.mxu0 0.0
    %900 = vmatpush1.xpose.msra.mxu0 0.0
    %901 = vmatprep.subr.mxu0 0.0
    %902 = vmatpush1.xpose.msra.mxu0 0.0
    %903 = vmatprep.subr.mxu0 0.0
    %904 = vmatpush1.xpose.msra.mxu0 0.0
    %905 = vmatprep.mubr.f32.mxu0 0.0
    %906 = vmatmul.mubr.f32.gmra.mrb[0].mxu0 %v837
    %v907 = vpop.f32.mrb[0].mxu0
    %v908 = vadd.f32 0.0, %v907
    %v909 = vpop.f32.mrb[0].mxu0
    %910 = vdwg.mxu0
    %911 = vrot.lane.b32.xlu0 %v145, 112
    %v912 = vpop.permute.xlu0 %911
    %913 = vrot.lane.b32.xlu0 %v155, 80
    %v914 = vpop.permute.xlu0 %913
    %v915 = vsel %vm169, %v912, 0
    %v917 = vsel %vm169, %v914, 0
    %919 = vmatprep.subr.mxu0 0.0
    %920 = vmatpush1.xpose.msra.mxu0 %v917
    %921 = vmatprep.subr.mxu0 0.0
    %922 = vmatpush1.xpose.msra.mxu0 0.0
    %923 = vmatprep.subr.mxu0 0.0
    %924 = vmatpush1.xpose.msra.mxu0 0.0
    %925 = vmatprep.subr.mxu0 0.0
    %926 = vmatpush1.xpose.msra.mxu0 0.0
    %927 = vmatprep.subr.mxu0 0.0
    %928 = vmatpush1.xpose.msra.mxu0 0.0
    %929 = vmatprep.subr.mxu0 0.0
    %930 = vmatpush1.xpose.msra.mxu0 0.0
    %931 = vmatprep.subr.mxu0 0.0
    %932 = vmatpush1.xpose.msra.mxu0 0.0
    %933 = vmatprep.subr.mxu0 0.0
    %934 = vmatpush1.xpose.msra.mxu0 0.0
    %935 = vmatprep.subr.mxu0 0.0
    %936 = vmatpush1.xpose.msra.mxu0 0.0
    %937 = vmatprep.subr.mxu0 0.0
    %938 = vmatpush1.xpose.msra.mxu0 0.0
    %939 = vmatprep.subr.mxu0 0.0
    %940 = vmatpush1.xpose.msra.mxu0 0.0
    %941 = vmatprep.subr.mxu0 0.0
    %942 = vmatpush1.xpose.msra.mxu0 0.0
    %943 = vmatprep.subr.mxu0 0.0
    %944 = vmatpush1.xpose.msra.mxu0 0.0
    %945 = vmatprep.subr.mxu0 0.0
    %946 = vmatpush1.xpose.msra.mxu0 0.0
    %947 = vmatprep.subr.mxu0 0.0
    %948 = vmatpush1.xpose.msra.mxu0 0.0
    %949 = vmatprep.subr.mxu0 0.0
    %950 = vmatpush1.xpose.msra.mxu0 0.0
    %951 = vmatprep.subr.mxu0 0.0
    %952 = vmatpush1.xpose.msra.mxu0 0.0
    %953 = vmatprep.subr.mxu0 0.0
    %954 = vmatpush1.xpose.msra.mxu0 0.0
    %955 = vmatprep.subr.mxu0 0.0
    %956 = vmatpush1.xpose.msra.mxu0 0.0
    %957 = vmatprep.subr.mxu0 0.0
    %958 = vmatpush1.xpose.msra.mxu0 0.0
    %959 = vmatprep.subr.mxu0 0.0
    %960 = vmatpush1.xpose.msra.mxu0 0.0
    %961 = vmatprep.subr.mxu0 0.0
    %962 = vmatpush1.xpose.msra.mxu0 0.0
    %963 = vmatprep.subr.mxu0 0.0
    %964 = vmatpush1.xpose.msra.mxu0 0.0
    %965 = vmatprep.subr.mxu0 0.0
    %966 = vmatpush1.xpose.msra.mxu0 0.0
    %967 = vmatprep.subr.mxu0 0.0
    %968 = vmatpush1.xpose.msra.mxu0 0.0
    %969 = vmatprep.subr.mxu0 0.0
    %970 = vmatpush1.xpose.msra.mxu0 0.0
    %971 = vmatprep.subr.mxu0 0.0
    %972 = vmatpush1.xpose.msra.mxu0 0.0
    %973 = vmatprep.subr.mxu0 0.0
    %974 = vmatpush1.xpose.msra.mxu0 0.0
    %975 = vmatprep.subr.mxu0 0.0
    %976 = vmatpush1.xpose.msra.mxu0 0.0
    %977 = vmatprep.subr.mxu0 0.0
    %978 = vmatpush1.xpose.msra.mxu0 0.0
    %979 = vmatprep.subr.mxu0 0.0
    %980 = vmatpush1.xpose.msra.mxu0 0.0
    %981 = vmatprep.subr.mxu0 0.0
    %982 = vmatpush1.xpose.msra.mxu0 0.0
    %983 = vmatprep.mubr.f32.mxu0 0.0
    %984 = vmatmul.mubr.f32.gmra.mrb[0].mxu0 %v915
    %v985 = vpop.f32.mrb[0].mxu0
    %v986 = vadd.f32 0.0, %v985
    %v987 = vpop.f32.mrb[0].mxu0
    %988 = vdwg.mxu0
    %v989 = vmul.f32 %v908, 0.35355338
    %v990 = vmul.f32 %v986, 0.35355338
    %v991 = vsel %vm169, %v989, -inf
    %992 = vmax.xlane.f32.xlu0 %v991
    %v993 = vpop.xlane.xlu0 %992
    %v994 = vsel %vm169, %v990, -inf
    %995 = vmax.xlane.f32.xlu0 %v994
    %v996 = vpop.xlane.xlu0 %995
    %v997 = vsub.f32 %v989, %v993
    %v998 = vsub.f32 %v990, %v996
    %v999 = vmul.f32 %v997, 1.442695
    %v1000 = vpow.pop %v999
    %v1001 = vmul.f32 %v998, 1.442695
    %v1002 = vpow.pop %v1001
    %v1003 = vsel %vm169, %v1000, 0.0
    %1004 = vadd.xlane.f32.xlu0 %v1003
    %v1005 = vpop.xlane.xlu0 %1004
    %v1006 = vsel %vm169, %v1002, 0.0
    %1007 = vadd.xlane.f32.xlu0 %v1006
    %v1008 = vpop.xlane.xlu0 %1007
    %v1009 = vrcp.pop %v1005
    %v1010 = vmul.f32 %v1000, %v1009
    %v1011 = vrcp.pop %v1008
    %v1012 = vmul.f32 %v1002, %v1011
    %1013 = vrot.lane.b32.xlu0 %v164, 48
    %v1014 = vpop.permute.xlu0 %1013
    %v1017 = vsel %vm169, %v1010, 0
    %1019 = vmatprep.subr.mxu0 0.0
    %1020 = vmatpush1.msra.mxu0 %v1014
    %1021 = vmatprep.subr.mxu0 0.0
    %1022 = vmatpush1.msra.mxu0 0.0
    %1023 = vmatprep.subr.mxu0 0.0
    %1024 = vmatpush1.msra.mxu0 0.0
    %1025 = vmatprep.subr.mxu0 0.0
    %1026 = vmatpush1.msra.mxu0 0.0
    %1027 = vmatprep.subr.mxu0 0.0
    %1028 = vmatpush1.msra.mxu0 0.0
    %1029 = vmatprep.subr.mxu0 0.0
    %1030 = vmatpush1.msra.mxu0 0.0
    %1031 = vmatprep.subr.mxu0 0.0
    %1032 = vmatpush1.msra.mxu0 0.0
    %1033 = vmatprep.subr.mxu0 0.0
    %1034 = vmatpush1.msra.mxu0 0.0
    %1035 = vmatprep.subr.mxu0 0.0
    %1036 = vmatpush1.msra.mxu0 0.0
    %1037 = vmatprep.subr.mxu0 0.0
    %1038 = vmatpush1.msra.mxu0 0.0
    %1039 = vmatprep.subr.mxu0 0.0
    %1040 = vmatpush1.msra.mxu0 0.0
    %1041 = vmatprep.subr.mxu0 0.0
    %1042 = vmatpush1.msra.mxu0 0.0
    %1043 = vmatprep.subr.mxu0 0.0
    %1044 = vmatpush1.msra.mxu0 0.0
    %1045 = vmatprep.subr.mxu0 0.0
    %1046 = vmatpush1.msra.mxu0 0.0
    %1047 = vmatprep.subr.mxu0 0.0
    %1048 = vmatpush1.msra.mxu0 0.0
    %1049 = vmatprep.subr.mxu0 0.0
    %1050 = vmatpush1.msra.mxu0 0.0
    %1051 = vmatprep.subr.mxu0 0.0
    %1052 = vmatpush1.msra.mxu0 0.0
    %1053 = vmatprep.subr.mxu0 0.0
    %1054 = vmatpush1.msra.mxu0 0.0
    %1055 = vmatprep.subr.mxu0 0.0
    %1056 = vmatpush1.msra.mxu0 0.0
    %1057 = vmatprep.subr.mxu0 0.0
    %1058 = vmatpush1.msra.mxu0 0.0
    %1059 = vmatprep.subr.mxu0 0.0
    %1060 = vmatpush1.msra.mxu0 0.0
    %1061 = vmatprep.subr.mxu0 0.0
    %1062 = vmatpush1.msra.mxu0 0.0
    %1063 = vmatprep.subr.mxu0 0.0
    %1064 = vmatpush1.msra.mxu0 0.0
    %1065 = vmatprep.subr.mxu0 0.0
    %1066 = vmatpush1.msra.mxu0 0.0
    %1067 = vmatprep.subr.mxu0 0.0
    %1068 = vmatpush1.msra.mxu0 0.0
    %1069 = vmatprep.subr.mxu0 0.0
    %1070 = vmatpush1.msra.mxu0 0.0
    %1071 = vmatprep.subr.mxu0 0.0
    %1072 = vmatpush1.msra.mxu0 0.0
    %1073 = vmatprep.subr.mxu0 0.0
    %1074 = vmatpush1.msra.mxu0 0.0
    %1075 = vmatprep.subr.mxu0 0.0
    %1076 = vmatpush1.msra.mxu0 0.0
    %1077 = vmatprep.subr.mxu0 0.0
    %1078 = vmatpush1.msra.mxu0 0.0
    %1079 = vmatprep.subr.mxu0 0.0
    %1080 = vmatpush1.msra.mxu0 0.0
    %1081 = vmatprep.subr.mxu0 0.0
    %1082 = vmatpush1.msra.mxu0 0.0
    %1083 = vmatprep.mubr.f32.mxu0 0.0
    %1084 = vmatmul.mubr.f32.gmra.mrb[0].mxu0 %v1017
    %v1085 = vpop.f32.mrb[0].mxu0
    %v1086 = vadd.f32 0.0, %v1085
    %v1087 = vpop.f32.mrb[0].mxu0
    %1088 = vdwg.mxu0
    %1089 = vrot.lane.b32.xlu0 %v165, 48
    %v1090 = vpop.permute.xlu0 %1089
    %v1093 = vsel %vm169, %v1012, 0
    %1095 = vmatprep.subr.mxu0 0.0
    %1096 = vmatpush1.msra.mxu0 %v1090
    %1097 = vmatprep.subr.mxu0 0.0
    %1098 = vmatpush1.msra.mxu0 0.0
    %1099 = vmatprep.subr.mxu0 0.0
    %1100 = vmatpush1.msra.mxu0 0.0
    %1101 = vmatprep.subr.mxu0 0.0
    %1102 = vmatpush1.msra.mxu0 0.0
    %1103 = vmatprep.subr.mxu0 0.0
    %1104 = vmatpush1.msra.mxu0 0.0
    %1105 = vmatprep.subr.mxu0 0.0
    %1106 = vmatpush1.msra.mxu0 0.0
    %1107 = vmatprep.subr.mxu0 0.0
    %1108 = vmatpush1.msra.mxu0 0.0
    %1109 = vmatprep.subr.mxu0 0.0
    %1110 = vmatpush1.msra.mxu0 0.0
    %1111 = vmatprep.subr.mxu0 0.0
    %1112 = vmatpush1.msra.mxu0 0.0
    %1113 = vmatprep.subr.mxu0 0.0
    %1114 = vmatpush1.msra.mxu0 0.0
    %1115 = vmatprep.subr.mxu0 0.0
    %1116 = vmatpush1.msra.mxu0 0.0
    %1117 = vmatprep.subr.mxu0 0.0
    %1118 = vmatpush1.msra.mxu0 0.0
    %1119 = vmatprep.subr.mxu0 0.0
    %1120 = vmatpush1.msra.mxu0 0.0
    %1121 = vmatprep.subr.mxu0 0.0
    %1122 = vmatpush1.msra.mxu0 0.0
    %1123 = vmatprep.subr.mxu0 0.0
    %1124 = vmatpush1.msra.mxu0 0.0
    %1125 = vmatprep.subr.mxu0 0.0
    %1126 = vmatpush1.msra.mxu0 0.0
    %1127 = vmatprep.subr.mxu0 0.0
    %1128 = vmatpush1.msra.mxu0 0.0
    %1129 = vmatprep.subr.mxu0 0.0
    %1130 = vmatpush1.msra.mxu0 0.0
    %1131 = vmatprep.subr.mxu0 0.0
    %1132 = vmatpush1.msra.mxu0 0.0
    %1133 = vmatprep.subr.mxu0 0.0
    %1134 = vmatpush1.msra.mxu0 0.0
    %1135 = vmatprep.subr.mxu0 0.0
    %1136 = vmatpush1.msra.mxu0 0.0
    %1137 = vmatprep.subr.mxu0 0.0
    %1138 = vmatpush1.msra.mxu0 0.0
    %1139 = vmatprep.subr.mxu0 0.0
    %1140 = vmatpush1.msra.mxu0 0.0
    %1141 = vmatprep.subr.mxu0 0.0
    %1142 = vmatpush1.msra.mxu0 0.0
    %1143 = vmatprep.subr.mxu0 0.0
    %1144 = vmatpush1.msra.mxu0 0.0
    %1145 = vmatprep.subr.mxu0 0.0
    %1146 = vmatpush1.msra.mxu0 0.0
    %1147 = vmatprep.subr.mxu0 0.0
    %1148 = vmatpush1.msra.mxu0 0.0
    %1149 = vmatprep.subr.mxu0 0.0
    %1150 = vmatpush1.msra.mxu0 0.0
    %1151 = vmatprep.subr.mxu0 0.0
    %1152 = vmatpush1.msra.mxu0 0.0
    %1153 = vmatprep.subr.mxu0 0.0
    %1154 = vmatpush1.msra.mxu0 0.0
    %1155 = vmatprep.subr.mxu0 0.0
    %1156 = vmatpush1.msra.mxu0 0.0
    %1157 = vmatprep.subr.mxu0 0.0
    %1158 = vmatpush1.msra.mxu0 0.0
    %1159 = vmatprep.mubr.f32.mxu0 0.0
    %1160 = vmatmul.mubr.f32.gmra.mrb[0].mxu0 %v1093
    %v1161 = vpop.f32.mrb[0].mxu0
    %v1162 = vadd.f32 0.0, %v1161
    %v1163 = vpop.f32.mrb[0].mxu0
    %1164 = vdwg.mxu0
    %1165 = vrot.lane.b32.xlu0 %v144, 104
    %v1166 = vpop.permute.xlu0 %1165
    %1167 = vrot.lane.b32.xlu0 %v154, 72
    %v1168 = vpop.permute.xlu0 %1167
    %v1169 = vsel %vm169, %v1166, 0
    %v1171 = vsel %vm169, %v1168, 0
    %1173 = vmatprep.subr.mxu0 0.0
    %1174 = vmatpush1.xpose.msra.mxu0 %v1171
    %1175 = vmatprep.subr.mxu0 0.0
    %1176 = vmatpush1.xpose.msra.mxu0 0.0
    %1177 = vmatprep.subr.mxu0 0.0
    %1178 = vmatpush1.xpose.msra.mxu0 0.0
    %1179 = vmatprep.subr.mxu0 0.0
    %1180 = vmatpush1.xpose.msra.mxu0 0.0
    %1181 = vmatprep.subr.mxu0 0.0
    %1182 = vmatpush1.xpose.msra.mxu0 0.0
    %1183 = vmatprep.subr.mxu0 0.0
    %1184 = vmatpush1.xpose.msra.mxu0 0.0
    %1185 = vmatprep.subr.mxu0 0.0
    %1186 = vmatpush1.xpose.msra.mxu0 0.0
    %1187 = vmatprep.subr.mxu0 0.0
    %1188 = vmatpush1.xpose.msra.mxu0 0.0
    %1189 = vmatprep.subr.mxu0 0.0
    %1190 = vmatpush1.xpose.msra.mxu0 0.0
    %1191 = vmatprep.subr.mxu0 0.0
    %1192 = vmatpush1.xpose.msra.mxu0 0.0
    %1193 = vmatprep.subr.mxu0 0.0
    %1194 = vmatpush1.xpose.msra.mxu0 0.0
    %1195 = vmatprep.subr.mxu0 0.0
    %1196 = vmatpush1.xpose.msra.mxu0 0.0
    %1197 = vmatprep.subr.mxu0 0.0
    %1198 = vmatpush1.xpose.msra.mxu0 0.0
    %1199 = vmatprep.subr.mxu0 0.0
    %1200 = vmatpush1.xpose.msra.mxu0 0.0
    %1201 = vmatprep.subr.mxu0 0.0
    %1202 = vmatpush1.xpose.msra.mxu0 0.0
    %1203 = vmatprep.subr.mxu0 0.0
    %1204 = vmatpush1.xpose.msra.mxu0 0.0
    %1205 = vmatprep.subr.mxu0 0.0
    %1206 = vmatpush1.xpose.msra.mxu0 0.0
    %1207 = vmatprep.subr.mxu0 0.0
    %1208 = vmatpush1.xpose.msra.mxu0 0.0
    %1209 = vmatprep.subr.mxu0 0.0
    %1210 = vmatpush1.xpose.msra.mxu0 0.0
    %1211 = vmatprep.subr.mxu0 0.0
    %1212 = vmatpush1.xpose.msra.mxu0 0.0
    %1213 = vmatprep.subr.mxu0 0.0
    %1214 = vmatpush1.xpose.msra.mxu0 0.0
    %1215 = vmatprep.subr.mxu0 0.0
    %1216 = vmatpush1.xpose.msra.mxu0 0.0
    %1217 = vmatprep.subr.mxu0 0.0
    %1218 = vmatpush1.xpose.msra.mxu0 0.0
    %1219 = vmatprep.subr.mxu0 0.0
    %1220 = vmatpush1.xpose.msra.mxu0 0.0
    %1221 = vmatprep.subr.mxu0 0.0
    %1222 = vmatpush1.xpose.msra.mxu0 0.0
    %1223 = vmatprep.subr.mxu0 0.0
    %1224 = vmatpush1.xpose.msra.mxu0 0.0
    %1225 = vmatprep.subr.mxu0 0.0
    %1226 = vmatpush1.xpose.msra.mxu0 0.0
    %1227 = vmatprep.subr.mxu0 0.0
    %1228 = vmatpush1.xpose.msra.mxu0 0.0
    %1229 = vmatprep.subr.mxu0 0.0
    %1230 = vmatpush1.xpose.msra.mxu0 0.0
    %1231 = vmatprep.subr.mxu0 0.0
    %1232 = vmatpush1.xpose.msra.mxu0 0.0
    %1233 = vmatprep.subr.mxu0 0.0
    %1234 = vmatpush1.xpose.msra.mxu0 0.0
    %1235 = vmatprep.subr.mxu0 0.0
    %1236 = vmatpush1.xpose.msra.mxu0 0.0
    %1237 = vmatprep.mubr.f32.mxu0 0.0
    %1238 = vmatmul.mubr.f32.gmra.mrb[0].mxu0 %v1169
    %v1239 = vpop.f32.mrb[0].mxu0
    %v1240 = vadd.f32 0.0, %v1239
    %v1241 = vpop.f32.mrb[0].mxu0
    %1242 = vdwg.mxu0
    %1243 = vrot.lane.b32.xlu0 %v145, 104
    %v1244 = vpop.permute.xlu0 %1243
    %1245 = vrot.lane.b32.xlu0 %v155, 72
    %v1246 = vpop.permute.xlu0 %1245
    %v1247 = vsel %vm169, %v1244, 0
    %v1249 = vsel %vm169, %v1246, 0
    %1251 = vmatprep.subr.mxu0 0.0
    %1252 = vmatpush1.xpose.msra.mxu0 %v1249
    %1253 = vmatprep.subr.mxu0 0.0
    %1254 = vmatpush1.xpose.msra.mxu0 0.0
    %1255 = vmatprep.subr.mxu0 0.0
    %1256 = vmatpush1.xpose.msra.mxu0 0.0
    %1257 = vmatprep.subr.mxu0 0.0
    %1258 = vmatpush1.xpose.msra.mxu0 0.0
    %1259 = vmatprep.subr.mxu0 0.0
    %1260 = vmatpush1.xpose.msra.mxu0 0.0
    %1261 = vmatprep.subr.mxu0 0.0
    %1262 = vmatpush1.xpose.msra.mxu0 0.0
    %1263 = vmatprep.subr.mxu0 0.0
    %1264 = vmatpush1.xpose.msra.mxu0 0.0
    %1265 = vmatprep.subr.mxu0 0.0
    %1266 = vmatpush1.xpose.msra.mxu0 0.0
    %1267 = vmatprep.subr.mxu0 0.0
    %1268 = vmatpush1.xpose.msra.mxu0 0.0
    %1269 = vmatprep.subr.mxu0 0.0
    %1270 = vmatpush1.xpose.msra.mxu0 0.0
    %1271 = vmatprep.subr.mxu0 0.0
    %1272 = vmatpush1.xpose.msra.mxu0 0.0
    %1273 = vmatprep.subr.mxu0 0.0
    %1274 = vmatpush1.xpose.msra.mxu0 0.0
    %1275 = vmatprep.subr.mxu0 0.0
    %1276 = vmatpush1.xpose.msra.mxu0 0.0
    %1277 = vmatprep.subr.mxu0 0.0
    %1278 = vmatpush1.xpose.msra.mxu0 0.0
    %1279 = vmatprep.subr.mxu0 0.0
    %1280 = vmatpush1.xpose.msra.mxu0 0.0
    %1281 = vmatprep.subr.mxu0 0.0
    %1282 = vmatpush1.xpose.msra.mxu0 0.0
    %1283 = vmatprep.subr.mxu0 0.0
    %1284 = vmatpush1.xpose.msra.mxu0 0.0
    %1285 = vmatprep.subr.mxu0 0.0
    %1286 = vmatpush1.xpose.msra.mxu0 0.0
    %1287 = vmatprep.subr.mxu0 0.0
    %1288 = vmatpush1.xpose.msra.mxu0 0.0
    %1289 = vmatprep.subr.mxu0 0.0
    %1290 = vmatpush1.xpose.msra.mxu0 0.0
    %1291 = vmatprep.subr.mxu0 0.0
    %1292 = vmatpush1.xpose.msra.mxu0 0.0
    %1293 = vmatprep.subr.mxu0 0.0
    %1294 = vmatpush1.xpose.msra.mxu0 0.0
    %1295 = vmatprep.subr.mxu0 0.0
    %1296 = vmatpush1.xpose.msra.mxu0 0.0
    %1297 = vmatprep.subr.mxu0 0.0
    %1298 = vmatpush1.xpose.msra.mxu0 0.0
    %1299 = vmatprep.subr.mxu0 0.0
    %1300 = vmatpush1.xpose.msra.mxu0 0.0
    %1301 = vmatprep.subr.mxu0 0.0
    %1302 = vmatpush1.xpose.msra.mxu0 0.0
    %1303 = vmatprep.subr.mxu0 0.0
    %1304 = vmatpush1.xpose.msra.mxu0 0.0
    %1305 = vmatprep.subr.mxu0 0.0
    %1306 = vmatpush1.xpose.msra.mxu0 0.0
    %1307 = vmatprep.subr.mxu0 0.0
    %1308 = vmatpush1.xpose.msra.mxu0 0.0
    %1309 = vmatprep.subr.mxu0 0.0
    %1310 = vmatpush1.xpose.msra.mxu0 0.0
    %1311 = vmatprep.subr.mxu0 0.0
    %1312 = vmatpush1.xpose.msra.mxu0 0.0
    %1313 = vmatprep.subr.mxu0 0.0
    %1314 = vmatpush1.xpose.msra.mxu0 0.0
    %1315 = vmatprep.mubr.f32.mxu0 0.0
    %1316 = vmatmul.mubr.f32.gmra.mrb[0].mxu0 %v1247
    %v1317 = vpop.f32.mrb[0].mxu0
    %v1318 = vadd.f32 0.0, %v1317
    %v1319 = vpop.f32.mrb[0].mxu0
    %1320 = vdwg.mxu0
    %v1321 = vmul.f32 %v1240, 0.35355338
    %v1322 = vmul.f32 %v1318, 0.35355338
    %v1323 = vsel %vm169, %v1321, -inf
    %1324 = vmax.xlane.f32.xlu0 %v1323
    %v1325 = vpop.xlane.xlu0 %1324
    %v1326 = vsel %vm169, %v1322, -inf
    %1327 = vmax.xlane.f32.xlu0 %v1326
    %v1328 = vpop.xlane.xlu0 %1327
    %v1329 = vsub.f32 %v1321, %v1325
    %v1330 = vsub.f32 %v1322, %v1328
    %v1331 = vmul.f32 %v1329, 1.442695
    %v1332 = vpow.pop %v1331
    %v1333 = vmul.f32 %v1330, 1.442695
    %v1334 = vpow.pop %v1333
    %v1335 = vsel %vm169, %v1332, 0.0
    %1336 = vadd.xlane.f32.xlu0 %v1335
    %v1337 = vpop.xlane.xlu0 %1336
    %v1338 = vsel %vm169, %v1334, 0.0
    %1339 = vadd.xlane.f32.xlu0 %v1338
    %v1340 = vpop.xlane.xlu0 %1339
    %v1341 = vrcp.pop %v1337
    %v1342 = vmul.f32 %v1332, %v1341
    %v1343 = vrcp.pop %v1340
    %v1344 = vmul.f32 %v1334, %v1343
    %1345 = vrot.lane.b32.xlu0 %v164, 40
    %v1346 = vpop.permute.xlu0 %1345
    %v1349 = vsel %vm169, %v1342, 0
    %1351 = vmatprep.subr.mxu0 0.0
    %1352 = vmatpush1.msra.mxu0 %v1346
    %1353 = vmatprep.subr.mxu0 0.0
    %1354 = vmatpush1.msra.mxu0 0.0
    %1355 = vmatprep.subr.mxu0 0.0
    %1356 = vmatpush1.msra.mxu0 0.0
    %1357 = vmatprep.subr.mxu0 0.0
    %1358 = vmatpush1.msra.mxu0 0.0
    %1359 = vmatprep.subr.mxu0 0.0
    %1360 = vmatpush1.msra.mxu0 0.0
    %1361 = vmatprep.subr.mxu0 0.0
    %1362 = vmatpush1.msra.mxu0 0.0
    %1363 = vmatprep.subr.mxu0 0.0
    %1364 = vmatpush1.msra.mxu0 0.0
    %1365 = vmatprep.subr.mxu0 0.0
    %1366 = vmatpush1.msra.mxu0 0.0
    %1367 = vmatprep.subr.mxu0 0.0
    %1368 = vmatpush1.msra.mxu0 0.0
    %1369 = vmatprep.subr.mxu0 0.0
    %1370 = vmatpush1.msra.mxu0 0.0
    %1371 = vmatprep.subr.mxu0 0.0
    %1372 = vmatpush1.msra.mxu0 0.0
    %1373 = vmatprep.subr.mxu0 0.0
    %1374 = vmatpush1.msra.mxu0 0.0
    %1375 = vmatprep.subr.mxu0 0.0
    %1376 = vmatpush1.msra.mxu0 0.0
    %1377 = vmatprep.subr.mxu0 0.0
    %1378 = vmatpush1.msra.mxu0 0.0
    %1379 = vmatprep.subr.mxu0 0.0
    %1380 = vmatpush1.msra.mxu0 0.0
    %1381 = vmatprep.subr.mxu0 0.0
    %1382 = vmatpush1.msra.mxu0 0.0
    %1383 = vmatprep.subr.mxu0 0.0
    %1384 = vmatpush1.msra.mxu0 0.0
    %1385 = vmatprep.subr.mxu0 0.0
    %1386 = vmatpush1.msra.mxu0 0.0
    %1387 = vmatprep.subr.mxu0 0.0
    %1388 = vmatpush1.msra.mxu0 0.0
    %1389 = vmatprep.subr.mxu0 0.0
    %1390 = vmatpush1.msra.mxu0 0.0
    %1391 = vmatprep.subr.mxu0 0.0
    %1392 = vmatpush1.msra.mxu0 0.0
    %1393 = vmatprep.subr.mxu0 0.0
    %1394 = vmatpush1.msra.mxu0 0.0
    %1395 = vmatprep.subr.mxu0 0.0
    %1396 = vmatpush1.msra.mxu0 0.0
    %1397 = vmatprep.subr.mxu0 0.0
    %1398 = vmatpush1.msra.mxu0 0.0
    %1399 = vmatprep.subr.mxu0 0.0
    %1400 = vmatpush1.msra.mxu0 0.0
    %1401 = vmatprep.subr.mxu0 0.0
    %1402 = vmatpush1.msra.mxu0 0.0
    %1403 = vmatprep.subr.mxu0 0.0
    %1404 = vmatpush1.msra.mxu0 0.0
    %1405 = vmatprep.subr.mxu0 0.0
    %1406 = vmatpush1.msra.mxu0 0.0
    %1407 = vmatprep.subr.mxu0 0.0
    %1408 = vmatpush1.msra.mxu0 0.0
    %1409 = vmatprep.subr.mxu0 0.0
    %1410 = vmatpush1.msra.mxu0 0.0
    %1411 = vmatprep.subr.mxu0 0.0
    %1412 = vmatpush1.msra.mxu0 0.0
    %1413 = vmatprep.subr.mxu0 0.0
    %1414 = vmatpush1.msra.mxu0 0.0
    %1415 = vmatprep.mubr.f32.mxu0 0.0
    %1416 = vmatmul.mubr.f32.gmra.mrb[0].mxu0 %v1349
    %v1417 = vpop.f32.mrb[0].mxu0
    %v1418 = vadd.f32 0.0, %v1417
    %v1419 = vpop.f32.mrb[0].mxu0
    %1420 = vdwg.mxu0
    %1421 = vrot.lane.b32.xlu0 %v165, 40
    %v1422 = vpop.permute.xlu0 %1421
    %v1425 = vsel %vm169, %v1344, 0
    %1427 = vmatprep.subr.mxu0 0.0
    %1428 = vmatpush1.msra.mxu0 %v1422
    %1429 = vmatprep.subr.mxu0 0.0
    %1430 = vmatpush1.msra.mxu0 0.0
    %1431 = vmatprep.subr.mxu0 0.0
    %1432 = vmatpush1.msra.mxu0 0.0
    %1433 = vmatprep.subr.mxu0 0.0
    %1434 = vmatpush1.msra.mxu0 0.0
    %1435 = vmatprep.subr.mxu0 0.0
    %1436 = vmatpush1.msra.mxu0 0.0
    %1437 = vmatprep.subr.mxu0 0.0
    %1438 = vmatpush1.msra.mxu0 0.0
    %1439 = vmatprep.subr.mxu0 0.0
    %1440 = vmatpush1.msra.mxu0 0.0
    %1441 = vmatprep.subr.mxu0 0.0
    %1442 = vmatpush1.msra.mxu0 0.0
    %1443 = vmatprep.subr.mxu0 0.0
    %1444 = vmatpush1.msra.mxu0 0.0
    %1445 = vmatprep.subr.mxu0 0.0
    %1446 = vmatpush1.msra.mxu0 0.0
    %1447 = vmatprep.subr.mxu0 0.0
    %1448 = vmatpush1.msra.mxu0 0.0
    %1449 = vmatprep.subr.mxu0 0.0
    %1450 = vmatpush1.msra.mxu0 0.0
    %1451 = vmatprep.subr.mxu0 0.0
    %1452 = vmatpush1.msra.mxu0 0.0
    %1453 = vmatprep.subr.mxu0 0.0
    %1454 = vmatpush1.msra.mxu0 0.0
    %1455 = vmatprep.subr.mxu0 0.0
    %1456 = vmatpush1.msra.mxu0 0.0
    %1457 = vmatprep.subr.mxu0 0.0
    %1458 = vmatpush1.msra.mxu0 0.0
    %1459 = vmatprep.subr.mxu0 0.0
    %1460 = vmatpush1.msra.mxu0 0.0
    %1461 = vmatprep.subr.mxu0 0.0
    %1462 = vmatpush1.msra.mxu0 0.0
    %1463 = vmatprep.subr.mxu0 0.0
    %1464 = vmatpush1.msra.mxu0 0.0
    %1465 = vmatprep.subr.mxu0 0.0
    %1466 = vmatpush1.msra.mxu0 0.0
    %1467 = vmatprep.subr.mxu0 0.0
    %1468 = vmatpush1.msra.mxu0 0.0
    %1469 = vmatprep.subr.mxu0 0.0
    %1470 = vmatpush1.msra.mxu0 0.0
    %1471 = vmatprep.subr.mxu0 0.0
    %1472 = vmatpush1.msra.mxu0 0.0
    %1473 = vmatprep.subr.mxu0 0.0
    %1474 = vmatpush1.msra.mxu0 0.0
    %1475 = vmatprep.subr.mxu0 0.0
    %1476 = vmatpush1.msra.mxu0 0.0
    %1477 = vmatprep.subr.mxu0 0.0
    %1478 = vmatpush1.msra.mxu0 0.0
    %1479 = vmatprep.subr.mxu0 0.0
    %1480 = vmatpush1.msra.mxu0 0.0
    %1481 = vmatprep.subr.mxu0 0.0
    %1482 = vmatpush1.msra.mxu0 0.0
    %1483 = vmatprep.subr.mxu0 0.0
    %1484 = vmatpush1.msra.mxu0 0.0
    %1485 = vmatprep.subr.mxu0 0.0
    %1486 = vmatpush1.msra.mxu0 0.0
    %1487 = vmatprep.subr.mxu0 0.0
    %1488 = vmatpush1.msra.mxu0 0.0
    %1489 = vmatprep.subr.mxu0 0.0
    %1490 = vmatpush1.msra.mxu0 0.0
    %1491 = vmatprep.mubr.f32.mxu0 0.0
    %1492 = vmatmul.mubr.f32.gmra.mrb[0].mxu0 %v1425
    %v1493 = vpop.f32.mrb[0].mxu0
    %v1494 = vadd.f32 0.0, %v1493
    %v1495 = vpop.f32.mrb[0].mxu0
    %1496 = vdwg.mxu0
    %1499 = vrot.lane.b32.xlu0 %v754, 8
    %v1500 = vpop.permute.xlu0 %1499
    %1501 = vrot.lane.b32.xlu0 %v830, 8
    %v1502 = vpop.permute.xlu0 %1501
    %1507 = vrot.lane.b32.xlu0 %v1086, 16
    %v1508 = vpop.permute.xlu0 %1507
    %1509 = vrot.lane.b32.xlu0 %v1162, 16
    %v1510 = vpop.permute.xlu0 %1509
    %1515 = vrot.lane.b32.xlu0 %v1418, 24
    %v1516 = vpop.permute.xlu0 %1515
    %1517 = vrot.lane.b32.xlu0 %v1494, 24
    %v1518 = vpop.permute.xlu0 %1517
    %v1521 = vsel %vm169, %v421, %v1500
    %v1522 = vsel %vm169, %v498, %v1502
    %vm1523 = vcmask 130048
    %v1524 = vsel %vm1523, %v1521, %v1508
    %v1525 = vsel %vm1523, %v1522, %v1510
    %vm1526 = vcmask 195584
    %v1527 = vsel %vm1526, %v1524, %v1516
    %v1528 = vsel %vm1526, %v1525, %v1518
    %v1529 = vlaneseq
    %v1530 = vshrl.u32 %v1529, 7
    %v1531 = vsub.s32 3, %v1530
    %v1532 = vrot.slane %v56, %v1531
    %1537 = vrot.lane.b32.xlu0 %v20, 32
    %v1538 = vpop.permute.xlu0 %1537
    %1539 = vrot.lane.b32.xlu0 %v22, 32
    %v1540 = vpop.permute.xlu0 %1539
    %1541 = vrot.lane.b32.xlu0 %v24, 32
    %v1542 = vpop.permute.xlu0 %1541
    %1543 = vrot.lane.b32.xlu0 %v26, 32
    %v1544 = vpop.permute.xlu0 %1543
    %v1550 = vsel %vm58, %v1527, 0
    %v1553 = vsel %vm58, %v1528, 0
    %1555 = vmatprep.subr.mxu0 0.0
    %1556 = vmatpush1.msra.mxu0 %v1538
    %1557 = vmatprep.subr.mxu0 0.0
    %1558 = vmatpush1.msra.mxu0 %v1540
    %1559 = vmatprep.subr.mxu0 0.0
    %1560 = vmatpush1.msra.mxu0 %v1542
    %1561 = vmatprep.subr.mxu0 0.0
    %1562 = vmatpush1.msra.mxu0 %v1544
    %1563 = vmatprep.subr.mxu0 0.0
    %1564 = vmatpush1.msra.mxu0 0.0
    %1565 = vmatprep.subr.mxu0 0.0
    %1566 = vmatpush1.msra.mxu0 0.0
    %1567 = vmatprep.subr.mxu0 0.0
    %1568 = vmatpush1.msra.mxu0 0.0
    %1569 = vmatprep.subr.mxu0 0.0
    %1570 = vmatpush1.msra.mxu0 0.0
    %1571 = vmatprep.subr.mxu0 0.0
    %1572 = vmatpush1.msra.mxu0 0.0
    %1573 = vmatprep.subr.mxu0 0.0
    %1574 = vmatpush1.msra.mxu0 0.0
    %1575 = vmatprep.subr.mxu0 0.0
    %1576 = vmatpush1.msra.mxu0 0.0
    %1577 = vmatprep.subr.mxu0 0.0
    %1578 = vmatpush1.msra.mxu0 0.0
    %1579 = vmatprep.subr.mxu0 0.0
    %1580 = vmatpush1.msra.mxu0 0.0
    %1581 = vmatprep.subr.mxu0 0.0
    %1582 = vmatpush1.msra.mxu0 0.0
    %1583 = vmatprep.subr.mxu0 0.0
    %1584 = vmatpush1.msra.mxu0 0.0
    %1585 = vmatprep.subr.mxu0 0.0
    %1586 = vmatpush1.msra.mxu0 0.0
    %1587 = vmatprep.subr.mxu0 0.0
    %1588 = vmatpush1.msra.mxu0 0.0
    %1589 = vmatprep.subr.mxu0 0.0
    %1590 = vmatpush1.msra.mxu0 0.0
    %1591 = vmatprep.subr.mxu0 0.0
    %1592 = vmatpush1.msra.mxu0 0.0
    %1593 = vmatprep.subr.mxu0 0.0
    %1594 = vmatpush1.msra.mxu0 0.0
    %1595 = vmatprep.subr.mxu0 0.0
    %1596 = vmatpush1.msra.mxu0 0.0
    %1597 = vmatprep.subr.mxu0 0.0
    %1598 = vmatpush1.msra.mxu0 0.0
    %1599 = vmatprep.subr.mxu0 0.0
    %1600 = vmatpush1.msra.mxu0 0.0
    %1601 = vmatprep.subr.mxu0 0.0
    %1602 = vmatpush1.msra.mxu0 0.0
    %1603 = vmatprep.subr.mxu0 0.0
    %1604 = vmatpush1.msra.mxu0 0.0
    %1605 = vmatprep.subr.mxu0 0.0
    %1606 = vmatpush1.msra.mxu0 0.0
    %1607 = vmatprep.subr.mxu0 0.0
    %1608 = vmatpush1.msra.mxu0 0.0
    %1609 = vmatprep.subr.mxu0 0.0
    %1610 = vmatpush1.msra.mxu0 0.0
    %1611 = vmatprep.subr.mxu0 0.0
    %1612 = vmatpush1.msra.mxu0 0.0
    %1613 = vmatprep.subr.mxu0 0.0
    %1614 = vmatpush1.msra.mxu0 0.0
    %1615 = vmatprep.subr.mxu0 0.0
    %1616 = vmatpush1.msra.mxu0 0.0
    %1617 = vmatprep.subr.mxu0 0.0
    %1618 = vmatpush1.msra.mxu0 0.0
    %1619 = vmatprep.mubr.f32.mxu0 0.0
    %1620 = vmatmul.mubr.f32.gmra.mrb[0].mxu0 %v1550
    %v1621 = vpop.f32.mrb[0].mxu0
    %v1622 = vadd.f32 %v1532, %v1621
    %v1623 = vpop.f32.mrb[0].mxu0
    %1624 = vmatprep.mubr.f32.mxu0 0.0
    %1625 = vmatmul.mubr.f32.gmra.mrb[0].mxu0 %v1553
    %v1626 = vpop.f32.mrb[0].mxu0
    %v1627 = vadd.f32 %v1532, %v1626
    %v1628 = vpop.f32.mrb[0].mxu0
    %1629 = vdwg.mxu0
    %v1630 = vadd.f32 %v18, %v1622
    %v1631 = vadd.f32 %v19, %v1627
    %v1632 = vsel %vm58, %v1630, 0.0
    %1633 = vadd.xlane.f32.xlu0 %v1632
    %v1634 = vpop.xlane.xlu0 %1633
    %v1635 = vsel %vm58, %v1631, 0.0
    %1636 = vadd.xlane.f32.xlu0 %v1635
    %v1637 = vpop.xlane.xlu0 %1636
    %v1638 = vrcp.pop 32.0
    %v1639 = vmul.f32 %v1634, %v1638
    %v1640 = vmul.f32 %v1637, %v1638
    %v1641 = vsub.f32 %v1630, %v1639
    %v1642 = vsub.f32 %v1631, %v1640
    %v1643 = vmul.f32 %v1641, %v1641
    %v1644 = vmul.f32 %v1642, %v1642
    %v1645 = vsel %vm58, %v1643, 0.0
    %1646 = vadd.xlane.f32.xlu0 %v1645
    %v1647 = vpop.xlane.xlu0 %1646
    %v1648 = vsel %vm58, %v1644, 0.0
    %1649 = vadd.xlane.f32.xlu0 %v1648
    %v1650 = vpop.xlane.xlu0 %1649
    %v1651 = vmul.f32 %v1647, %v1638
    %v1652 = vmul.f32 %v1650, %v1638
    %v1653 = vadd.f32 %v1651, 1e-05
    %v1654 = vadd.f32 %v1652, 1e-05
    %v1655 = vrsqrt.pop %v1653
    %v1656 = vrsqrt.pop %v1654
    %v1657 = vmul.f32 %v1641, %v1655
    %v1658 = vmul.f32 %v1642, %v1656
    %v1659 = vlaneseq
    %v1660 = vshrl.u32 %v1659, 7
    %v1661 = vsub.s32 6, %v1660
    %v1662 = vrot.slane %v56, %v1661
    %v1663 = vmul.f32 %v1657, %v1662
    %v1664 = vmul.f32 %v1658, %v1662
    %v1665 = vlaneseq
    %v1666 = vshrl.u32 %v1665, 7
    %v1667 = vsub.s32 7, %v1666
    %v1668 = vrot.slane %v56, %v1667
    %v1669 = vadd.f32 %v1663, %v1668
    %v1670 = vadd.f32 %v1664, %v1668
    %v1671 = vlaneseq
    %v1672 = vshrl.u32 %v1671, 7
    %v1673 = vsub.s32 4, %v1672
    %v1674 = vrot.slane %v56, %v1673
    %v1676 = vsel %vm58, %v1669, 0
    %v1679 = vsel %vm58, %v1670, 0
    %1681 = vmatprep.subr.mxu0 0.0
    %1682 = vmatpush1.msra.mxu0 %v21
    %1683 = vmatprep.subr.mxu0 0.0
    %1684 = vmatpush1.msra.mxu0 %v23
    %1685 = vmatprep.subr.mxu0 0.0
    %1686 = vmatpush1.msra.mxu0 %v25
    %1687 = vmatprep.subr.mxu0 0.0
    %1688 = vmatpush1.msra.mxu0 %v27
    %1689 = vmatprep.subr.mxu0 0.0
    %1690 = vmatpush1.msra.mxu0 0.0
    %1691 = vmatprep.subr.mxu0 0.0
    %1692 = vmatpush1.msra.mxu0 0.0
    %1693 = vmatprep.subr.mxu0 0.0
    %1694 = vmatpush1.msra.mxu0 0.0
    %1695 = vmatprep.subr.mxu0 0.0
    %1696 = vmatpush1.msra.mxu0 0.0
    %1697 = vmatprep.subr.mxu0 0.0
    %1698 = vmatpush1.msra.mxu0 0.0
    %1699 = vmatprep.subr.mxu0 0.0
    %1700 = vmatpush1.msra.mxu0 0.0
    %1701 = vmatprep.subr.mxu0 0.0
    %1702 = vmatpush1.msra.mxu0 0.0
    %1703 = vmatprep.subr.mxu0 0.0
    %1704 = vmatpush1.msra.mxu0 0.0
    %1705 = vmatprep.subr.mxu0 0.0
    %1706 = vmatpush1.msra.mxu0 0.0
    %1707 = vmatprep.subr.mxu0 0.0
    %1708 = vmatpush1.msra.mxu0 0.0
    %1709 = vmatprep.subr.mxu0 0.0
    %1710 = vmatpush1.msra.mxu0 0.0
    %1711 = vmatprep.subr.mxu0 0.0
    %1712 = vmatpush1.msra.mxu0 0.0
    %1713 = vmatprep.subr.mxu0 0.0
    %1714 = vmatpush1.msra.mxu0 0.0
    %1715 = vmatprep.subr.mxu0 0.0
    %1716 = vmatpush1.msra.mxu0 0.0
    %1717 = vmatprep.subr.mxu0 0.0
    %1718 = vmatpush1.msra.mxu0 0.0
    %1719 = vmatprep.subr.mxu0 0.0
    %1720 = vmatpush1.msra.mxu0 0.0
    %1721 = vmatprep.subr.mxu0 0.0
    %1722 = vmatpush1.msra.mxu0 0.0
    %1723 = vmatprep.subr.mxu0 0.0
    %1724 = vmatpush1.msra.mxu0 0.0
    %1725 = vmatprep.subr.mxu0 0.0
    %1726 = vmatpush1.msra.mxu0 0.0
    %1727 = vmatprep.subr.mxu0 0.0
    %1728 = vmatpush1.msra.mxu0 0.0
    %1729 = vmatprep.subr.mxu0 0.0
    %1730 = vmatpush1.msra.mxu0 0.0
    %1731 = vmatprep.subr.mxu0 0.0
    %1732 = vmatpush1.msra.mxu0 0.0
    %1733 = vmatprep.subr.mxu0 0.0
    %1734 = vmatpush1.msra.mxu0 0.0
    %1735 = vmatprep.subr.mxu0 0.0
    %1736 = vmatpush1.msra.mxu0 0.0
    %1737 = vmatprep.subr.mxu0 0.0
    %1738 = vmatpush1.msra.mxu0 0.0
    %1739 = vmatprep.subr.mxu0 0.0
    %1740 = vmatpush1.msra.mxu0 0.0
    %1741 = vmatprep.subr.mxu0 0.0
    %1742 = vmatpush1.msra.mxu0 0.0
    %1743 = vmatprep.subr.mxu0 0.0
    %1744 = vmatpush1.msra.mxu0 0.0
    %1745 = vmatprep.mubr.f32.mxu0 0.0
    %1746 = vmatmul.mubr.f32.gmra.mrb[0].mxu0 %v1676
    %v1747 = vpop.f32.mrb[0].mxu0
    %v1748 = vadd.f32 %v1674, %v1747
    %v1749 = vpop.f32.mrb[0].mxu0
    %1750 = vmatprep.mubr.f32.mxu0 0.0
    %1751 = vmatmul.mubr.f32.gmra.mrb[0].mxu0 %v1679
    %v1752 = vpop.f32.mrb[0].mxu0
    %v1753 = vadd.f32 %v1674, %v1752
    %v1754 = vpop.f32.mrb[0].mxu0
    %1755 = vdwg.mxu0
    %v1756 = vmax.f32 %v1748, 0.0
    %v1757 = vmax.f32 %v1753, 0.0
    %v1758 = vlaneseq
    %v1759 = vshrl.u32 %v1758, 7
    %v1760 = vsub.s32 5, %v1759
    %v1761 = vrot.slane %v56, %v1760
    %1762 = vmatprep.subr.mxu0 0.0
    %1763 = vmatpush1.msra.mxu0 %v28
    %1764 = vmatprep.subr.mxu0 0.0
    %1765 = vmatpush1.msra.mxu0 %v29
    %1766 = vmatprep.subr.mxu0 0.0
    %1767 = vmatpush1.msra.mxu0 %v30
    %1768 = vmatprep.subr.mxu0 0.0
    %1769 = vmatpush1.msra.mxu0 %v31
    %1770 = vmatprep.subr.mxu0 0.0
    %1771 = vmatpush1.msra.mxu0 %v32
    %1772 = vmatprep.subr.mxu0 0.0
    %1773 = vmatpush1.msra.mxu0 %v33
    %1774 = vmatprep.subr.mxu0 0.0
    %1775 = vmatpush1.msra.mxu0 %v34
    %1776 = vmatprep.subr.mxu0 0.0
    %1777 = vmatpush1.msra.mxu0 %v35
    %1778 = vmatprep.subr.mxu0 0.0
    %1779 = vmatpush1.msra.mxu0 %v36
    %1780 = vmatprep.subr.mxu0 0.0
    %1781 = vmatpush1.msra.mxu0 %v37
    %1782 = vmatprep.subr.mxu0 0.0
    %1783 = vmatpush1.msra.mxu0 %v38
    %1784 = vmatprep.subr.mxu0 0.0
    %1785 = vmatpush1.msra.mxu0 %v39
    %1786 = vmatprep.subr.mxu0 0.0
    %1787 = vmatpush1.msra.mxu0 %v40
    %1788 = vmatprep.subr.mxu0 0.0
    %1789 = vmatpush1.msra.mxu0 %v41
    %1790 = vmatprep.subr.mxu0 0.0
    %1791 = vmatpush1.msra.mxu0 %v42
    %1792 = vmatprep.subr.mxu0 0.0
    %1793 = vmatpush1.msra.mxu0 %v43
    %1794 = vmatprep.subr.mxu0 0.0
    %1795 = vmatpush1.msra.mxu0 0.0
    %1796 = vmatprep.subr.mxu0 0.0
    %1797 = vmatpush1.msra.mxu0 0.0
    %1798 = vmatprep.subr.mxu0 0.0
    %1799 = vmatpush1.msra.mxu0 0.0
    %1800 = vmatprep.subr.mxu0 0.0
    %1801 = vmatpush1.msra.mxu0 0.0
    %1802 = vmatprep.subr.mxu0 0.0
    %1803 = vmatpush1.msra.mxu0 0.0
    %1804 = vmatprep.subr.mxu0 0.0
    %1805 = vmatpush1.msra.mxu0 0.0
    %1806 = vmatprep.subr.mxu0 0.0
    %1807 = vmatpush1.msra.mxu0 0.0
    %1808 = vmatprep.subr.mxu0 0.0
    %1809 = vmatpush1.msra.mxu0 0.0
    %1810 = vmatprep.subr.mxu0 0.0
    %1811 = vmatpush1.msra.mxu0 0.0
    %1812 = vmatprep.subr.mxu0 0.0
    %1813 = vmatpush1.msra.mxu0 0.0
    %1814 = vmatprep.subr.mxu0 0.0
    %1815 = vmatpush1.msra.mxu0 0.0
    %1816 = vmatprep.subr.mxu0 0.0
    %1817 = vmatpush1.msra.mxu0 0.0
    %1818 = vmatprep.subr.mxu0 0.0
    %1819 = vmatpush1.msra.mxu0 0.0
    %1820 = vmatprep.subr.mxu0 0.0
    %1821 = vmatpush1.msra.mxu0 0.0
    %1822 = vmatprep.subr.mxu0 0.0
    %1823 = vmatpush1.msra.mxu0 0.0
    %1824 = vmatprep.subr.mxu0 0.0
    %1825 = vmatpush1.msra.mxu0 0.0
    %1826 = vmatprep.mubr.f32.mxu0 0.0
    %1827 = vmatmul.mubr.f32.gmra.mrb[0].mxu0 %v1756
    %v1828 = vpop.f32.mrb[0].mxu0
    %v1829 = vadd.f32 %v1761, %v1828
    %v1830 = vpop.f32.mrb[0].mxu0
    %1831 = vmatprep.mubr.f32.mxu0 0.0
    %1832 = vmatmul.mubr.f32.gmra.mrb[0].mxu0 %v1757
    %v1833 = vpop.f32.mrb[0].mxu0
    %v1834 = vadd.f32 %v1761, %v1833
    %v1835 = vpop.f32.mrb[0].mxu0
    %1836 = vdwg.mxu0
    %v1837 = vadd.f32 %v1669, %v1829
    %v1838 = vadd.f32 %v1670, %v1834
    %v1839 = vsel %vm58, %v1837, 0.0
    %1840 = vadd.xlane.f32.xlu0 %v1839
    %v1841 = vpop.xlane.xlu0 %1840
    %v1842 = vsel %vm58, %v1838, 0.0
    %1843 = vadd.xlane.f32.xlu0 %v1842
    %v1844 = vpop.xlane.xlu0 %1843
    %v1845 = vmul.f32 %v1841, %v1638
    %v1846 = vmul.f32 %v1844, %v1638
    %v1847 = vsub.f32 %v1837, %v1845
    %v1848 = vsub.f32 %v1838, %v1846
    %v1849 = vmul.f32 %v1847, %v1847
    %v1850 = vmul.f32 %v1848, %v1848
    %v1851 = vsel %vm58, %v1849, 0.0
    %1852 = vadd.xlane.f32.xlu0 %v1851
    %v1853 = vpop.xlane.xlu0 %1852
    %v1854 = vsel %vm58, %v1850, 0.0
    %1855 = vadd.xlane.f32.xlu0 %v1854
    %v1856 = vpop.xlane.xlu0 %1855
    %v1857 = vmul.f32 %v1853, %v1638
    %v1858 = vmul.f32 %v1856, %v1638
    %v1859 = vadd.f32 %v1857, 1e-05
    %v1860 = vadd.f32 %v1858, 1e-05
    %v1861 = vrsqrt.pop %v1859
    %v1862 = vrsqrt.pop %v1860
    %v1863 = vmul.f32 %v1847, %v1861
    %v1864 = vmul.f32 %v1848, %v1862
    %v1865 = vlaneseq
    %v1866 = vshrl.u32 %v1865, 7
    %v1867 = vsub.s32 0, %v1866
    %v1868 = vrot.slane %v57, %v1867
    %v1869 = vmul.f32 %v1863, %v1868
    %v1870 = vmul.f32 %v1864, %v1868
    %v1871 = vlaneseq
    %v1872 = vshrl.u32 %v1871, 7
    %v1873 = vsub.s32 1, %v1872
    %v1874 = vrot.slane %v57, %v1873
    %v1875 = vadd.f32 %v1869, %v1874
    %v1876 = vadd.f32 %v1870, %v1874
    %v1879 = vrot.slane %v1875, 7
    %v1880 = vrot.slane %v1876, 7
    %vm1883 = vcmask 1040384
    %v1884 = vsel %vm1883, %v1879, %v1879
    %v1885 = vsel %vm1883, %v1880, %v1880
    %v1886 = vrot.slane %v1875, 1
    %v1887 = vrot.slane %v1876, 1
    %vm1890 = vcmask 1046528
    %v1891 = vsel %vm1890, %v1886, %v1886
    %v1892 = vsel %vm1890, %v1887, %v1887
    %v1893 = vsel %vm58, %v1875, 0
    %v1895 = vsel %vm58, %v1876, 0
    %1897 = vmatprep.subr.mxu0 0.0
    %1898 = vmatpush1.msra.mxu0 %v48
    %1899 = vmatprep.subr.mxu0 0.0
    %1900 = vmatpush1.msra.mxu0 %v49
    %1901 = vmatprep.subr.mxu0 0.0
    %1902 = vmatpush1.msra.mxu0 %v50
    %1903 = vmatprep.subr.mxu0 0.0
    %1904 = vmatpush1.msra.mxu0 %v51
    %1905 = vmatprep.subr.mxu0 0.0
    %1906 = vmatpush1.msra.mxu0 0.0
    %1907 = vmatprep.subr.mxu0 0.0
    %1908 = vmatpush1.msra.mxu0 0.0
    %1909 = vmatprep.subr.mxu0 0.0
    %1910 = vmatpush1.msra.mxu0 0.0
    %1911 = vmatprep.subr.mxu0 0.0
    %1912 = vmatpush1.msra.mxu0 0.0
    %1913 = vmatprep.subr.mxu0 0.0
    %1914 = vmatpush1.msra.mxu0 0.0
    %1915 = vmatprep.subr.mxu0 0.0
    %1916 = vmatpush1.msra.mxu0 0.0
    %1917 = vmatprep.subr.mxu0 0.0
    %1918 = vmatpush1.msra.mxu0 0.0
    %1919 = vmatprep.subr.mxu0 0.0
    %1920 = vmatpush1.msra.mxu0 0.0
    %1921 = vmatprep.subr.mxu0 0.0
    %1922 = vmatpush1.msra.mxu0 0.0
    %1923 = vmatprep.subr.mxu0 0.0
    %1924 = vmatpush1.msra.mxu0 0.0
    %1925 = vmatprep.subr.mxu0 0.0
    %1926 = vmatpush1.msra.mxu0 0.0
    %1927 = vmatprep.subr.mxu0 0.0
    %1928 = vmatpush1.msra.mxu0 0.0
    %1929 = vmatprep.subr.mxu0 0.0
    %1930 = vmatpush1.msra.mxu0 0.0
    %1931 = vmatprep.subr.mxu0 0.0
    %1932 = vmatpush1.msra.mxu0 0.0
    %1933 = vmatprep.subr.mxu0 0.0
    %1934 = vmatpush1.msra.mxu0 0.0
    %1935 = vmatprep.subr.mxu0 0.0
    %1936 = vmatpush1.msra.mxu0 0.0
    %1937 = vmatprep.subr.mxu0 0.0
    %1938 = vmatpush1.msra.mxu0 0.0
    %1939 = vmatprep.subr.mxu0 0.0
    %1940 = vmatpush1.msra.mxu0 0.0
    %1941 = vmatprep.subr.mxu0 0.0
    %1942 = vmatpush1.msra.mxu0 0.0
    %1943 = vmatprep.subr.mxu0 0.0
    %1944 = vmatpush1.msra.mxu0 0.0
    %1945 = vmatprep.subr.mxu0 0.0
    %1946 = vmatpush1.msra.mxu0 0.0
    %1947 = vmatprep.subr.mxu0 0.0
    %1948 = vmatpush1.msra.mxu0 0.0
    %1949 = vmatprep.subr.mxu0 0.0
    %1950 = vmatpush1.msra.mxu0 0.0
    %1951 = vmatprep.subr.mxu0 0.0
    %1952 = vmatpush1.msra.mxu0 0.0
    %1953 = vmatprep.subr.mxu0 0.0
    %1954 = vmatpush1.msra.mxu0 0.0
    %1955 = vmatprep.subr.mxu0 0.0
    %1956 = vmatpush1.msra.mxu0 0.0
    %1957 = vmatprep.subr.mxu0 0.0
    %1958 = vmatpush1.msra.mxu0 0.0
    %1959 = vmatprep.subr.mxu0 0.0
    %1960 = vmatpush1.msra.mxu0 0.0
    %1961 = vmatprep.mubr.f32.mxu0 0.0
    %1962 = vmatmul.mubr.f32.gmra.mrb[0].mxu0 %v1893
    %v1963 = vpop.f32.mrb[0].mxu0
    %v1964 = vadd.f32 0.0, %v1963
    %v1965 = vpop.f32.mrb[0].mxu0
    %1966 = vmatprep.mubr.f32.mxu0 0.0
    %1967 = vmatmul.mubr.f32.gmra.mrb[0].mxu0 %v1895
    %v1968 = vpop.f32.mrb[0].mxu0
    %v1969 = vadd.f32 0.0, %v1968
    %v1970 = vpop.f32.mrb[0].mxu0
    %1971 = vdwg.mxu0
    %v1973 = vsel %vm58, %v1884, 0
    %v1976 = vsel %vm58, %v1885, 0
    %1978 = vmatprep.subr.mxu0 0.0
    %1979 = vmatpush1.msra.mxu0 %v44
    %1980 = vmatprep.subr.mxu0 0.0
    %1981 = vmatpush1.msra.mxu0 %v45
    %1982 = vmatprep.subr.mxu0 0.0
    %1983 = vmatpush1.msra.mxu0 %v46
    %1984 = vmatprep.subr.mxu0 0.0
    %1985 = vmatpush1.msra.mxu0 %v47
    %1986 = vmatprep.subr.mxu0 0.0
    %1987 = vmatpush1.msra.mxu0 0.0
    %1988 = vmatprep.subr.mxu0 0.0
    %1989 = vmatpush1.msra.mxu0 0.0
    %1990 = vmatprep.subr.mxu0 0.0
    %1991 = vmatpush1.msra.mxu0 0.0
    %1992 = vmatprep.subr.mxu0 0.0
    %1993 = vmatpush1.msra.mxu0 0.0
    %1994 = vmatprep.subr.mxu0 0.0
    %1995 = vmatpush1.msra.mxu0 0.0
    %1996 = vmatprep.subr.mxu0 0.0
    %1997 = vmatpush1.msra.mxu0 0.0
    %1998 = vmatprep.subr.mxu0 0.0
    %1999 = vmatpush1.msra.mxu0 0.0
    %2000 = vmatprep.subr.mxu0 0.0
    %2001 = vmatpush1.msra.mxu0 0.0
    %2002 = vmatprep.subr.mxu0 0.0
    %2003 = vmatpush1.msra.mxu0 0.0
    %2004 = vmatprep.subr.mxu0 0.0
    %2005 = vmatpush1.msra.mxu0 0.0
    %2006 = vmatprep.subr.mxu0 0.0
    %2007 = vmatpush1.msra.mxu0 0.0
    %2008 = vmatprep.subr.mxu0 0.0
    %2009 = vmatpush1.msra.mxu0 0.0
    %2010 = vmatprep.subr.mxu0 0.0
    %2011 = vmatpush1.msra.mxu0 0.0
    %2012 = vmatprep.subr.mxu0 0.0
    %2013 = vmatpush1.msra.mxu0 0.0
    %2014 = vmatprep.subr.mxu0 0.0
    %2015 = vmatpush1.msra.mxu0 0.0
    %2016 = vmatprep.subr.mxu0 0.0
    %2017 = vmatpush1.msra.mxu0 0.0
    %2018 = vmatprep.subr.mxu0 0.0
    %2019 = vmatpush1.msra.mxu0 0.0
    %2020 = vmatprep.subr.mxu0 0.0
    %2021 = vmatpush1.msra.mxu0 0.0
    %2022 = vmatprep.subr.mxu0 0.0
    %2023 = vmatpush1.msra.mxu0 0.0
    %2024 = vmatprep.subr.mxu0 0.0
    %2025 = vmatpush1.msra.mxu0 0.0
    %2026 = vmatprep.subr.mxu0 0.0
    %2027 = vmatpush1.msra.mxu0 0.0
    %2028 = vmatprep.subr.mxu0 0.0
    %2029 = vmatpush1.msra.mxu0 0.0
    %2030 = vmatprep.subr.mxu0 0.0
    %2031 = vmatpush1.msra.mxu0 0.0
    %2032 = vmatprep.subr.mxu0 0.0
    %2033 = vmatpush1.msra.mxu0 0.0
    %2034 = vmatprep.subr.mxu0 0.0
    %2035 = vmatpush1.msra.mxu0 0.0
    %2036 = vmatprep.subr.mxu0 0.0
    %2037 = vmatpush1.msra.mxu0 0.0
    %2038 = vmatprep.subr.mxu0 0.0
    %2039 = vmatpush1.msra.mxu0 0.0
    %2040 = vmatprep.subr.mxu0 0.0
    %2041 = vmatpush1.msra.mxu0 0.0
    %2042 = vmatprep.mubr.f32.mxu0 0.0
    %2043 = vmatmul.mubr.f32.gmra.mrb[0].mxu0 %v1973
    %v2044 = vpop.f32.mrb[0].mxu0
    %v2045 = vadd.f32 %v1964, %v2044
    %v2046 = vpop.f32.mrb[0].mxu0
    %2047 = vmatprep.mubr.f32.mxu0 0.0
    %2048 = vmatmul.mubr.f32.gmra.mrb[0].mxu0 %v1976
    %v2049 = vpop.f32.mrb[0].mxu0
    %v2050 = vadd.f32 %v1969, %v2049
    %v2051 = vpop.f32.mrb[0].mxu0
    %2052 = vdwg.mxu0
    %v2054 = vsel %vm58, %v1891, 0
    %v2057 = vsel %vm58, %v1892, 0
    %2059 = vmatprep.subr.mxu0 0.0
    %2060 = vmatpush1.msra.mxu0 %v52
    %2061 = vmatprep.subr.mxu0 0.0
    %2062 = vmatpush1.msra.mxu0 %v53
    %2063 = vmatprep.subr.mxu0 0.0
    %2064 = vmatpush1.msra.mxu0 %v54
    %2065 = vmatprep.subr.mxu0 0.0
    %2066 = vmatpush1.msra.mxu0 %v55
    %2067 = vmatprep.subr.mxu0 0.0
    %2068 = vmatpush1.msra.mxu0 0.0
    %2069 = vmatprep.subr.mxu0 0.0
    %2070 = vmatpush1.msra.mxu0 0.0
    %2071 = vmatprep.subr.mxu0 0.0
    %2072 = vmatpush1.msra.mxu0 0.0
    %2073 = vmatprep.subr.mxu0 0.0
    %2074 = vmatpush1.msra.mxu0 0.0
    %2075 = vmatprep.subr.mxu0 0.0
    %2076 = vmatpush1.msra.mxu0 0.0
    %2077 = vmatprep.subr.mxu0 0.0
    %2078 = vmatpush1.msra.mxu0 0.0
    %2079 = vmatprep.subr.mxu0 0.0
    %2080 = vmatpush1.msra.mxu0 0.0
    %2081 = vmatprep.subr.mxu0 0.0
    %2082 = vmatpush1.msra.mxu0 0.0
    %2083 = vmatprep.subr.mxu0 0.0
    %2084 = vmatpush1.msra.mxu0 0.0
    %2085 = vmatprep.subr.mxu0 0.0
    %2086 = vmatpush1.msra.mxu0 0.0
    %2087 = vmatprep.subr.mxu0 0.0
    %2088 = vmatpush1.msra.mxu0 0.0
    %2089 = vmatprep.subr.mxu0 0.0
    %2090 = vmatpush1.msra.mxu0 0.0
    %2091 = vmatprep.subr.mxu0 0.0
    %2092 = vmatpush1.msra.mxu0 0.0
    %2093 = vmatprep.subr.mxu0 0.0
    %2094 = vmatpush1.msra.mxu0 0.0
    %2095 = vmatprep.subr.mxu0 0.0
    %2096 = vmatpush1.msra.mxu0 0.0
    %2097 = vmatprep.subr.mxu0 0.0
    %2098 = vmatpush1.msra.mxu0 0.0
    %2099 = vmatprep.subr.mxu0 0.0
    %2100 = vmatpush1.msra.mxu0 0.0
    %2101 = vmatprep.subr.mxu0 0.0
    %2102 = vmatpush1.msra.mxu0 0.0
    %2103 = vmatprep.subr.mxu0 0.0
    %2104 = vmatpush1.msra.mxu0 0.0
    %2105 = vmatprep.subr.mxu0 0.0
    %2106 = vmatpush1.msra.mxu0 0.0
    %2107 = vmatprep.subr.mxu0 0.0
    %2108 = vmatpush1.msra.mxu0 0.0
    %2109 = vmatprep.subr.mxu0 0.0
    %2110 = vmatpush1.msra.mxu0 0.0
    %2111 = vmatprep.subr.mxu0 0.0
    %2112 = vmatpush1.msra.mxu0 0.0
    %2113 = vmatprep.subr.mxu0 0.0
    %2114 = vmatpush1.msra.mxu0 0.0
    %2115 = vmatprep.subr.mxu0 0.0
    %2116 = vmatpush1.msra.mxu0 0.0
    %2117 = vmatprep.subr.mxu0 0.0
    %2118 = vmatpush1.msra.mxu0 0.0
    %2119 = vmatprep.subr.mxu0 0.0
    %2120 = vmatpush1.msra.mxu0 0.0
    %2121 = vmatprep.subr.mxu0 0.0
    %2122 = vmatpush1.msra.mxu0 0.0
    %2123 = vmatprep.mubr.f32.mxu0 0.0
    %2124 = vmatmul.mubr.f32.gmra.mrb[0].mxu0 %v2054
    %v2125 = vpop.f32.mrb[0].mxu0
    %v2126 = vadd.f32 0.0, %v2125
    %v2127 = vpop.f32.mrb[0].mxu0
    %2128 = vmatprep.mubr.f32.mxu0 0.0
    %2129 = vmatmul.mubr.f32.gmra.mrb[0].mxu0 %v2057
    %v2130 = vpop.f32.mrb[0].mxu0
    %v2131 = vadd.f32 0.0, %v2130
    %v2132 = vpop.f32.mrb[0].mxu0
    %2133 = vdwg.mxu0
    %v2134 = vadd.f32 %v2045, %v2126
    %v2135 = vadd.f32 %v2050, %v2131
    %v2136 = vlaneseq
    %v2137 = vshrl.u32 %v2136, 7
    %v2138 = vsub.s32 2, %v2137
    %v2139 = vrot.slane %v57, %v2138
    %v2140 = vadd.f32 %v2134, %v2139
    %v2141 = vadd.f32 %v2135, %v2139
    %v2142 = vlaneseq
    %v2143 = vshrl.u32 %v2142, 7
    %v2144 = vsub.s32 5, %v2143
    %v2145 = vrot.slane %v57, %v2144
    %v2146 = vsub.f32 %v2140, %v2145
    %v2147 = vsub.f32 %v2141, %v2145
    %v2148 = vadd.f32 %v57, 1e-05
    %v2149 = vrsqrt.pop %v2148
    %v2150 = vlaneseq
    %v2151 = vshrl.u32 %v2150, 7
    %v2152 = vsub.s32 6, %v2151
    %v2153 = vrot.slane %v2149, %v2152
    %v2154 = vmul.f32 %v2146, %v2153
    %v2155 = vmul.f32 %v2147, %v2153
    %v2156 = vlaneseq
    %v2157 = vshrl.u32 %v2156, 7
    %v2158 = vsub.s32 3, %v2157
    %v2159 = vrot.slane %v57, %v2158
    %v2160 = vmul.f32 %v2154, %v2159
    %v2161 = vmul.f32 %v2155, %v2159
    %v2162 = vlaneseq
    %v2163 = vshrl.u32 %v2162, 7
    %v2164 = vsub.s32 4, %v2163
    %v2165 = vrot.slane %v57, %v2164
    %v2166 = vadd.f32 %v2160, %v2165
    %v2167 = vadd.f32 %v2161, %v2165
    %vm2168 = vcmp.gt.f32.partialorder %v2166, 0.0
    %vm2169 = vcmp.gt.f32.partialorder %v2167, 0.0
    %v2170 = vmul.f32 %v2166, 1.442695
    %v2171 = vpow.pop %v2170
    %v2172 = vmul.f32 %v2167, 1.442695
    %v2173 = vpow.pop %v2172
    %v2174 = vsub.f32 %v2171, 1.0
    %v2175 = vsub.f32 %v2173, 1.0
    %v2176 = vsel %vm2168, %v2166, %v2174
    %v2177 = vsel %vm2169, %v2167, %v2175
    %v2178 = vmax.f32 %v2176, %v2177
    %2179 = vst.msk [vmem:[#allocation2] sm:$0xff] %vm58, %v2178
    // Predicated region
    $region18: #{tpu_custom_call.1} parent=1 // pred_check
      _
    $region19: #{tpu_custom_call.1} parent=1 // pred_check_branch
      %2181 = sbr.rel (0) target = $region21
    $region20: #{tpu_custom_call.1} parent=1 // pred_region
      %s2183 = ssub.s32 128, 128
      %2184 = vsyncadd [#allocation3], %s2183
      %s2186 = sshll.u32 [#allocation2], 4
      %s2187 = int_to_ptr.vmem [resolvable:$true] %s2186
      %2189 = dma.vmem_to_hbm [thread:$0]  %s2187, 128, %s4, [#allocation3]
    $region21: #{tpu_custom_call.1} parent=1 // pred_fallthru
      _
    // Predicated region
    $region22: #{tpu_custom_call.1} parent=1 // pred_check
      _
    $region23: #{tpu_custom_call.1} parent=1 // pred_check_branch
      %2191 = sbr.rel (0) target = $region25
    $region24: #{tpu_custom_call.1} parent=1 // pred_region
      %2192 = dma.done [#allocation3], 128
    $region25: #{tpu_custom_call.1} parent=1 // pred_fallthru
      _
    %2193 = vsyncpa [#allocation3], 1

</llo_original>
